<compile_context>
chip_gen: v7x
topology: tpu7x:2x2x1
jax: 0.10.0
libtpu: 0.0.40
codegen_flags: <defaults>
</compile_context>

<pallas_src>
import functools

import jax
import jax.numpy as jnp
from jax import lax
from jax.experimental import pallas as pl
from jax.experimental.pallas import tpu as pltpu

EPS = 1e-5                       # PyTorch BatchNorm2d default eps
VMEM_LIMIT = 32 * 1024 * 1024    # explicit scoped-VMEM limit (safe on v5e/v6e/v7x)
VMEM_BUDGET = 20 * 1024 * 1024   # tile-size planning budget (double-buffered)


# ----------------------------- helpers --------------------------------------

def _round_up(x, m):
    return (x + m - 1) // m * m


def _choose_tile_m(M, K, Fp):
    """Largest M tile (multiple of 128) whose double-buffered working set fits
    the VMEM budget: bf16 (tm,K) patches + f32 (tm,Fp) output + bf16 (K,Fp)
    resident weight + small stats blocks."""
    per_row = 2 * (2 * K + 4 * Fp) + 4 * Fp
    fixed = 2 * 2 * K * Fp + 4 * 4 * Fp
    tm = (VMEM_BUDGET - fixed) // max(per_row, 1)
    tm = max(128, min(2048, tm))
    tm = (tm // 128) * 128
    return min(tm, _round_up(M, 128))


def _pad_vec(v, Fp, fill=0.0):
    """(F,) -> (1, Fp) f32, padded with `fill`."""
    F_ = v.shape[0]
    return jnp.pad(v.astype(jnp.float32), (0, Fp - F_),
                   constant_values=fill).reshape(1, Fp)


def _im2col(x_nhwc, stride):
    """(N, H, W, C) -> (N*Ho*Wo, C*9) patches, column order (c, kh, kw)."""
    N, H, W, C = x_nhwc.shape
    xp = jnp.pad(x_nhwc, ((0, 0), (1, 1), (1, 1), (0, 0)))
    Ho = (H + 2 - 3) // stride + 1
    Wo = (W + 2 - 3) // stride + 1
    cols = []
    for kh in range(3):
        for kw in range(3):
            cols.append(
                xp[:, kh:kh + stride * Ho:stride, kw:kw + stride * Wo:stride, :])
    patches = jnp.stack(cols, axis=-1).reshape(N * Ho * Wo, C * 9)
    return patches


def _prep_patches(x_nhwc, stride, Mp):
    """im2col, pad M rows with zeros to Mp, cast to bf16 for the MXU."""
    patches = _im2col(x_nhwc, stride)
    M = patches.shape[0]
    patches = jnp.pad(patches, ((0, Mp - M), (0, 0))).astype(jnp.bfloat16)
    return patches


def _prep_weight(w, Fp):
    """Torch (F, Cin, 3, 3) -> (Cin*9, Fp) bf16, zero-padded output channels."""
    F_ = w.shape[0]
    K = w.shape[1] * 9
    wmat = w.reshape(F_, K).T
    return jnp.pad(wmat, ((0, 0), (0, Fp - F_))).astype(jnp.bfloat16)


# ----------------------------- Pallas kernels -------------------------------

def _conv_gemm_stats_kernel(a_ref, w_ref, y_ref, ps_ref, pq_ref):
    # conv-as-GEMM hot path: bf16 (tm, K) @ (K, Fp) -> f32, plus fused
    # per-tile partial sum / sum-of-squares for BatchNorm batch statistics.
    y = jnp.dot(a_ref[...], w_ref[...], preferred_element_type=jnp.float32)
    y_ref[...] = y
    ps_ref[...] = jnp.sum(y, axis=0, keepdims=True).reshape(ps_ref.shape)
    pq_ref[...] = jnp.sum(y * y, axis=0, keepdims=True).reshape(pq_ref.shape)


def _bn_act_kernel(y_ref, mean_ref, var_ref, g_ref, b_ref, o_ref, *, relu):
    inv = lax.rsqrt(var_ref[...] + EPS)
    out = (y_ref[...] - mean_ref[...]) * (inv * g_ref[...]) + b_ref[...]
    if relu:
        out = jnp.maximum(out, 0.0)
    o_ref[...] = out


def _bn_add_relu_kernel(y_ref, mean_ref, var_ref, g_ref, b_ref, res_ref, o_ref):
    inv = lax.rsqrt(var_ref[...] + EPS)
    out = (y_ref[...] - mean_ref[...]) * (inv * g_ref[...]) + b_ref[...]
    o_ref[...] = jnp.maximum(out + res_ref[...], 0.0)


def _bn2_bn3_add_relu_kernel(y2_ref, m2_ref, v2_ref, g2_ref, b2_ref,
                             y3_ref, m3_ref, v3_ref, g3_ref, b3_ref, o_ref):
    a = (y2_ref[...] - m2_ref[...]) * (lax.rsqrt(v2_ref[...] + EPS) * g2_ref[...]) + b2_ref[...]
    b = (y3_ref[...] - m3_ref[...]) * (lax.rsqrt(v3_ref[...] + EPS) * g3_ref[...]) + b3_ref[...]
    o_ref[...] = jnp.maximum(a + b, 0.0)


# ----------------------------- kernel wrappers -------------------------------

def _cparams():
    return pltpu.CompilerParams(dimension_semantics=("parallel",),
                                vmem_limit_bytes=VMEM_LIMIT)


def conv_gemm_stats(patches, wmat, tm):
    """y = patches @ wmat (f32), plus per-tile partial sum/sumsq (G, 1, Fp)."""
    Mp, K = patches.shape
    Fp = wmat.shape[1]
    G = Mp // tm
    return pl.pallas_call(
        _conv_gemm_stats_kernel,
        out_shape=(jax.ShapeDtypeStruct((Mp, Fp), jnp.float32),
                   jax.ShapeDtypeStruct((G, 1, Fp), jnp.float32),
                   jax.ShapeDtypeStruct((G, 1, Fp), jnp.float32)),
        grid=(G,),
        in_specs=[pl.BlockSpec((tm, K), lambda i: (i, 0)),
                  pl.BlockSpec((K, Fp), lambda i: (0, 0))],
        out_specs=(pl.BlockSpec((tm, Fp), lambda i: (i, 0)),
                   pl.BlockSpec((1, 1, Fp), lambda i: (i, 0, 0)),
                   pl.BlockSpec((1, 1, Fp), lambda i: (i, 0, 0))),
        compiler_params=_cparams(),
    )(patches, wmat)


def _finalize_stats(ps, pq, m_true):
    s = ps.sum(axis=0)                     # (1, Fp) — tiny, reduce in JAX
    sq = pq.sum(axis=0)
    mean = s / m_true                      # divide by true M (padded rows are 0)
    var = jnp.maximum(sq / m_true - mean * mean, 0.0)
    return mean, var


def bn_apply(y, mean, var, gamma, beta, *, relu, tm):
    Mp, Fp = y.shape
    G = Mp // tm
    row = pl.BlockSpec((tm, Fp), lambda i: (i, 0))
    vec = pl.BlockSpec((1, Fp), lambda i: (0, 0))
    return pl.pallas_call(
        functools.partial(_bn_act_kernel, relu=relu),
        out_shape=jax.ShapeDtypeStruct((Mp, Fp), jnp.float32),
        grid=(G,),
        in_specs=[row, vec, vec, vec, vec],
        out_specs=row,
        compiler_params=_cparams(),
    )(y, mean, var, gamma, beta)


def bn_add_relu(y, mean, var, gamma, beta, res, *, tm):
    Mp, Fp = y.shape
    G = Mp // tm
    row = pl.BlockSpec((tm, Fp), lambda i: (i, 0))
    vec = pl.BlockSpec((1, Fp), lambda i: (0, 0))
    return pl.pallas_call(
        _bn_add_relu_kernel,
        out_shape=jax.ShapeDtypeStruct((Mp, Fp), jnp.float32),
        grid=(G,),
        in_specs=[row, vec, vec, vec, vec, row],
        out_specs=row,
        compiler_params=_cparams(),
    )(y, mean, var, gamma, beta, res)


def bn2_bn3_add_relu(y2, m2, v2, g2, b2, y3, m3, v3, g3, b3, *, tm):
    Mp, Fp = y2.shape
    G = Mp // tm
    row = pl.BlockSpec((tm, Fp), lambda i: (i, 0))
    vec = pl.BlockSpec((1, Fp), lambda i: (0, 0))
    return pl.pallas_call(
        _bn2_bn3_add_relu_kernel,
        out_shape=jax.ShapeDtypeStruct((Mp, Fp), jnp.float32),
        grid=(G,),
        in_specs=[row, vec, vec, vec, vec, row, vec, vec, vec, vec],
        out_specs=row,
        compiler_params=_cparams(),
    )(y2, m2, v2, g2, b2, y3, m3, v3, g3, b3)


# ------------------------------- forward -------------------------------------

@functools.partial(jax.jit, static_argnums=(2,))
def basic_block(x_nchw, params, stride):
    """Forward of Basic_block.  x_nchw: (N, Cin, H, W) -> (N, F, Ho, Wo)."""
    x_nhwc = jnp.transpose(x_nchw, (0, 2, 3, 1)).astype(jnp.float32)
    N, H, W, Cin = x_nhwc.shape
    F_ = params["w1"].shape[0]
    Fp = _round_up(F_, 128)                         # lane-dense channel dim
    Ho = (H + 2 - 3) // stride + 1
    Wo = (W + 2 - 3) // stride + 1
    M = N * Ho * Wo
    tm = _choose_tile_m(M, 9 * max(Cin, F_), Fp)    # one tile size for the block
    Mp = _round_up(M, tm)

    # ---- conv1 -> bn1 -> relu (conv bias folded out exactly by BN) ----------
    p1 = _prep_patches(x_nhwc, stride, Mp)          # shared by conv1 & conv3
    w1 = _prep_weight(params["w1"], Fp)
    y1, s1, q1 = conv_gemm_stats(p1, w1, tm)
    m1, v1 = _finalize_stats(s1, q1, M)
    o1 = bn_apply(y1, m1, v1,
                  _pad_vec(params["g1"], Fp, 1.0), _pad_vec(params["be1"], Fp),
                  relu=True, tm=tm)                 # (Mp, Fp)

    # ---- conv2 -> fused batch stats -----------------------------------------
    o1_nhwc = o1[:M, :F_].reshape(N, Ho, Wo, F_)
    p2 = _prep_patches(o1_nhwc, 1, Mp)
    w2 = _prep_weight(params["w2"], Fp)
    y2, s2, q2 = conv_gemm_stats(p2, w2, tm)
    m2, v2 = _finalize_stats(s2, q2, M)
    g2 = _pad_vec(params["g2"], Fp, 1.0)
    be2 = _pad_vec(params["be2"], Fp)

    # ---- shortcut + fused bn2(+bn3) + add + relu -----------------------------
    if stride == 2:
        w3 = _prep_weight(params["w3"], Fp)
        y3, s3, q3 = conv_gemm_stats(p1, w3, tm)    # reuses conv1 patches
        m3, v3 = _finalize_stats(s3, q3, M)
        out = bn2_bn3_add_relu(y2, m2, v2, g2, be2,
                               y3, m3, v3,
                               _pad_vec(params["g3"], Fp, 1.0),
                               _pad_vec(params["be3"], Fp), tm=tm)
    else:
        assert Cin == F_ and Ho == H and Wo == W, \
            "identity shortcut requires matching channel/spatial dims"
        res = x_nhwc.reshape(M, Cin)
        res = jnp.pad(res, ((0, Mp - M), (0, Fp - Cin)))
        out = bn_add_relu(y2, m2, v2, g2, be2, res, tm=tm)

    out_nhwc = out[:M, :F_].reshape(N, Ho, Wo, F_)
    return jnp.transpose(out_nhwc, (0, 3, 1, 2))    # back to NCHW


# ------------------------- pure-JAX reference (check) -------------------------

def _ref_block(x_nchw, params, stride):
    x = x_nchw.astype(jnp.float32)

    def conv(inp, w, b, s):
        y = lax.conv_general_dilated(inp, w, window_strides=(s, s),
                                     padding=((1, 1), (1, 1)),
                                     dimension_numbers=("NCHW", "OIHW", "NCHW"))
        return y + b.reshape(1, -1, 1, 1)

    def bn(y, g, be):
        mean = y.mean(axis=(0, 2, 3), keepdims=True)
        var = y.var(axis=(0, 2, 3), keepdims=True)          # biased (training)
        return g.reshape(1, -1, 1, 1) * (y - mean) * lax.rsqrt(var + EPS) \
            + be.reshape(1, -1, 1, 1)

    o = jax.nn.relu(bn(conv(x, params["w1"], params["b1"], stride),
                       params["g1"], params["be1"]))
    o = bn(conv(o, params["w2"], params["b2"], 1), params["g2"], params["be2"])
    sc = x
    if stride == 2:
        sc = bn(conv(x, params["w3"], params["b3"], stride),
                params["g3"], params["be3"])
    return jax.nn.relu(o + sc)


# --------------------------------- main ---------------------------------------

def _make_params(key, in_channel, num_filter, stride):
    ks = jax.random.split(key, 6)
    p = {
        "w1": 0.1 * jax.random.normal(ks[0], (num_filter, in_channel, 3, 3), jnp.float32),
        "b1": 0.1 * jax.random.normal(ks[1], (num_filter,), jnp.float32),
        "g1": jnp.ones((num_filter,), jnp.float32),
        "be1": jnp.zeros((num_filter,), jnp.float32),
        "w2": 0.1 * jax.random.normal(ks[2], (num_filter, num_filter, 3, 3), jnp.float32),
        "b2": 0.1 * jax.random.normal(ks[3], (num_filter,), jnp.float32),
        "g2": jnp.ones((num_filter,), jnp.float32),
        "be2": jnp.zeros((num_filter,), jnp.float32),
    }
    if stride == 2:
        p.update({
            "w3": 0.1 * jax.random.normal(ks[4], (num_filter, in_channel, 3, 3), jnp.float32),
            "b3": 0.1 * jax.random.normal(ks[5], (num_filter,), jnp.float32),
            "g3": jnp.ones((num_filter,), jnp.float32),
            "be3": jnp.zeros((num_filter,), jnp.float32),
        })
    return p


if __name__ == "__main__":
    key = jax.random.PRNGKey(0)
    kx, kp, kx2, kp2 = jax.random.split(key, 4)

    # stride-2 block with projection shortcut
    in_channel, num_filter, stride = 4, 8, 2
    x = jax.random.normal(kx, (2, in_channel, 16, 16), jnp.float32)   # NCHW
    params = _make_params(kp, in_channel, num_filter, stride)
    out = basic_block(x, params, stride)
    jax.block_until_ready(out)
    assert out.shape == (2, num_filter, 8, 8)
    ref = _ref_block(x, params, stride)
    assert float(jnp.max(jnp.abs(out - ref))) < 0.2   # bf16-MXU tolerance

    # stride-1 block with identity shortcut
    x1 = jax.random.normal(kx2, (2, num_filter, 16, 16), jnp.float32)
    params1 = _make_params(kp2, num_filter, num_filter, 1)
    out1 = basic_block(x1, params1, 1)
    jax.block_until_ready(out1)
    assert out1.shape == (2, num_filter, 16, 16)
    ref1 = _ref_block(x1, params1, 1)
    assert float(jnp.max(jnp.abs(out1 - ref1))) < 0.2

    print("KERNEL_OK")
</pallas_src>

<mosaic_0001>
module attributes {stable_mosaic.version = 11 : i64} {
  func.func @_conv_gemm_stats_kernel(%arg0: i32, %arg1: memref<128x36xbf16, #tpu.memory_space<vmem>>, %arg2: memref<36x128xbf16, #tpu.memory_space<vmem>>, %arg3: memref<128x128xf32, #tpu.memory_space<vmem>>, %arg4: memref<1x1x128xf32, #tpu.memory_space<vmem>>, %arg5: memref<1x1x128xf32, #tpu.memory_space<vmem>>) attributes {dimension_semantics = [#tpu.dimension_semantics<parallel>], iteration_bounds = array<i64: 1>, scalar_prefetch = 0 : i64, scratch_operands = 0 : i64, tpu.core_type = #tpu.core_type<tc>, window_params = [{transform_indices = @transform_0, window_bounds = array<i64: 128, 36>}, {pipeline_mode = #tpu.pipeline_mode<synchronous>, transform_indices = @transform_1, window_bounds = array<i64: 36, 128>}, {transform_indices = @transform_2, window_bounds = array<i64: 128, 128>}, {transform_indices = @transform_3, window_bounds = array<i64: 1, 1, 128>}, {transform_indices = @transform_4, window_bounds = array<i64: 1, 1, 128>}]} {
    %c0 = arith.constant 0 : index
    %c0_0 = arith.constant 0 : index
    %0 = vector.load %arg1[%c0, %c0_0] : memref<128x36xbf16, #tpu.memory_space<vmem>>, vector<128x36xbf16>
    %c0_1 = arith.constant 0 : index
    %c0_2 = arith.constant 0 : index
    %1 = vector.load %arg2[%c0_1, %c0_2] : memref<36x128xbf16, #tpu.memory_space<vmem>>, vector<36x128xbf16>
    %cst = arith.constant dense<0.000000e+00> : vector<128x128xf32>
    %2 = tpu.matmul %0, %1, %cst {dimension_numbers = #tpu.dot_dimension_numbers<[1], [0], [0], [1], [0, 0, 1, 1], [], []>} : vector<128x36xbf16>, vector<36x128xbf16>, vector<128x128xf32> -> vector<128x128xf32>
    %c0_3 = arith.constant 0 : index
    %c0_4 = arith.constant 0 : index
    %3 = vector.load %arg3[%c0_3, %c0_4] : memref<128x128xf32, #tpu.memory_space<vmem>>, vector<128x128xf32>
    tpu.vector_store %arg3[%c0_3, %c0_4], %2 {strides = array<i32>} : memref<128x128xf32, #tpu.memory_space<vmem>>, vector<128x128xf32>,
    %cst_5 = arith.constant dense<0.000000e+00> : vector<128xf32>
    %4 = vector.multi_reduction <add>, %2, %cst_5 [0] : vector<128x128xf32> to vector<128xf32>
    %5 = vector.shape_cast %4 : vector<128xf32> to vector<1x128xf32>
    %6 = vector.shape_cast %5 : vector<1x128xf32> to vector<1x1x128xf32>
    %c0_6 = arith.constant 0 : index
    %c0_7 = arith.constant 0 : index
    %c0_8 = arith.constant 0 : index
    %7 = vector.load %arg4[%c0_6, %c0_7, %c0_8] : memref<1x1x128xf32, #tpu.memory_space<vmem>>, vector<1x1x128xf32>
    tpu.vector_store %arg4[%c0_6, %c0_7, %c0_8], %6 {strides = array<i32>} : memref<1x1x128xf32, #tpu.memory_space<vmem>>, vector<1x1x128xf32>,
    %8 = arith.mulf %2, %2 : vector<128x128xf32>
    %cst_9 = arith.constant dense<0.000000e+00> : vector<128xf32>
    %9 = vector.multi_reduction <add>, %8, %cst_9 [0] : vector<128x128xf32> to vector<128xf32>
    %10 = vector.shape_cast %9 : vector<128xf32> to vector<1x128xf32>
    %11 = vector.shape_cast %10 : vector<1x128xf32> to vector<1x1x128xf32>
    %c0_10 = arith.constant 0 : index
    %c0_11 = arith.constant 0 : index
    %c0_12 = arith.constant 0 : index
    %12 = vector.load %arg5[%c0_10, %c0_11, %c0_12] : memref<1x1x128xf32, #tpu.memory_space<vmem>>, vector<1x1x128xf32>
    tpu.vector_store %arg5[%c0_10, %c0_11, %c0_12], %11 {strides = array<i32>} : memref<1x1x128xf32, #tpu.memory_space<vmem>>, vector<1x1x128xf32>,
    return
  }
  func.func @transform_0(%arg0: i32) -> (i32, i32) {
    %c0_i32 = arith.constant 0 : i32
    %c0_i32_0 = arith.constant 0 : i32
    return %arg0, %c0_i32 : i32, i32
  }
  func.func @transform_1(%arg0: i32) -> (i32, i32) {
    %c0_i32 = arith.constant 0 : i32
    %c0_i32_0 = arith.constant 0 : i32
    %c0_i32_1 = arith.constant 0 : i32
    return %c0_i32, %c0_i32_0 : i32, i32
  }
  func.func @transform_2(%arg0: i32) -> (i32, i32) {
    %c0_i32 = arith.constant 0 : i32
    %c0_i32_0 = arith.constant 0 : i32
    return %arg0, %c0_i32 : i32, i32
  }
  func.func @transform_3(%arg0: i32) -> (i32, i32, i32) {
    %c0_i32 = arith.constant 0 : i32
    %c0_i32_0 = arith.constant 0 : i32
    %c0_i32_1 = arith.constant 0 : i32
    return %arg0, %c0_i32, %c0_i32_0 : i32, i32, i32
  }
  func.func @transform_4(%arg0: i32) -> (i32, i32, i32) {
    %c0_i32 = arith.constant 0 : i32
    %c0_i32_0 = arith.constant 0 : i32
    %c0_i32_1 = arith.constant 0 : i32
    return %arg0, %c0_i32, %c0_i32_0 : i32, i32, i32
  }
}

module attributes {stable_mosaic.version = 11 : i64} {
  func.func @_bn_act_kernel(%arg0: i32, %arg1: memref<128x128xf32, #tpu.memory_space<vmem>>, %arg2: memref<1x128xf32, #tpu.memory_space<vmem>>, %arg3: memref<1x128xf32, #tpu.memory_space<vmem>>, %arg4: memref<1x128xf32, #tpu.memory_space<vmem>>, %arg5: memref<1x128xf32, #tpu.memory_space<vmem>>, %arg6: memref<128x128xf32, #tpu.memory_space<vmem>>) attributes {dimension_semantics = [#tpu.dimension_semantics<parallel>], iteration_bounds = array<i64: 1>, scalar_prefetch = 0 : i64, scratch_operands = 0 : i64, tpu.core_type = #tpu.core_type<tc>, window_params = [{transform_indices = @transform_0, window_bounds = array<i64: 128, 128>}, {pipeline_mode = #tpu.pipeline_mode<synchronous>, transform_indices = @transform_1, window_bounds = array<i64: 1, 128>}, {pipeline_mode = #tpu.pipeline_mode<synchronous>, transform_indices = @transform_2, window_bounds = array<i64: 1, 128>}, {pipeline_mode = #tpu.pipeline_mode<synchronous>, transform_indices = @transform_3, window_bounds = array<i64: 1, 128>}, {pipeline_mode = #tpu.pipeline_mode<synchronous>, transform_indices = @transform_4, window_bounds = array<i64: 1, 128>}, {transform_indices = @transform_5, window_bounds = array<i64: 128, 128>}]} {
    %c0 = arith.constant 0 : index
    %c0_0 = arith.constant 0 : index
    %0 = vector.load %arg3[%c0, %c0_0] : memref<1x128xf32, #tpu.memory_space<vmem>>, vector<1x128xf32>
    %cst = arith.constant 9.99999974E-6 : f32
    %1 = vector.broadcast %cst : f32 to vector<1x128xf32>
    %2 = arith.addf %0, %1 : vector<1x128xf32>
    %3 = math.rsqrt %2 : vector<1x128xf32>
    %c0_1 = arith.constant 0 : index
    %c0_2 = arith.constant 0 : index
    %4 = vector.load %arg1[%c0_1, %c0_2] : memref<128x128xf32, #tpu.memory_space<vmem>>, vector<128x128xf32>
    %c0_3 = arith.constant 0 : index
    %c0_4 = arith.constant 0 : index
    %5 = vector.load %arg2[%c0_3, %c0_4] : memref<1x128xf32, #tpu.memory_space<vmem>>, vector<1x128xf32>
    %6 = vector.broadcast %5 : vector<1x128xf32> to vector<128x128xf32>
    %7 = arith.subf %4, %6 : vector<128x128xf32>
    %c0_5 = arith.constant 0 : index
    %c0_6 = arith.constant 0 : index
    %8 = vector.load %arg4[%c0_5, %c0_6] : memref<1x128xf32, #tpu.memory_space<vmem>>, vector<1x128xf32>
    %9 = arith.mulf %3, %8 : vector<1x128xf32>
    %10 = vector.broadcast %9 : vector<1x128xf32> to vector<128x128xf32>
    %11 = arith.mulf %7, %10 : vector<128x128xf32>
    %c0_7 = arith.constant 0 : index
    %c0_8 = arith.constant 0 : index
    %12 = vector.load %arg5[%c0_7, %c0_8] : memref<1x128xf32, #tpu.memory_space<vmem>>, vector<1x128xf32>
    %13 = vector.broadcast %12 : vector<1x128xf32> to vector<128x128xf32>
    %14 = arith.addf %11, %13 : vector<128x128xf32>
    %cst_9 = arith.constant 0.000000e+00 : f32
    %15 = vector.broadcast %cst_9 : f32 to vector<128x128xf32>
    %16 = arith.maximumf %14, %15 : vector<128x128xf32>
    %c0_10 = arith.constant 0 : index
    %c0_11 = arith.constant 0 : index
    %17 = vector.load %arg6[%c0_10, %c0_11] : memref<128x128xf32, #tpu.memory_space<vmem>>, vector<128x128xf32>
    tpu.vector_store %arg6[%c0_10, %c0_11], %16 {strides = array<i32>} : memref<128x128xf32, #tpu.memory_space<vmem>>, vector<128x128xf32>,
    return
  }
  func.func @transform_0(%arg0: i32) -> (i32, i32) {
    %c0_i32 = arith.constant 0 : i32
    %c0_i32_0 = arith.constant 0 : i32
    return %arg0, %c0_i32 : i32, i32
  }
  func.func @transform_1(%arg0: i32) -> (i32, i32) {
    %c0_i32 = arith.constant 0 : i32
    %c0_i32_0 = arith.constant 0 : i32
    %c0_i32_1 = arith.constant 0 : i32
    return %c0_i32, %c0_i32_0 : i32, i32
  }
  func.func @transform_2(%arg0: i32) -> (i32, i32) {
    %c0_i32 = arith.constant 0 : i32
    %c0_i32_0 = arith.constant 0 : i32
    %c0_i32_1 = arith.constant 0 : i32
    return %c0_i32, %c0_i32_0 : i32, i32
  }
  func.func @transform_3(%arg0: i32) -> (i32, i32) {
    %c0_i32 = arith.constant 0 : i32
    %c0_i32_0 = arith.constant 0 : i32
    %c0_i32_1 = arith.constant 0 : i32
    return %c0_i32, %c0_i32_0 : i32, i32
  }
  func.func @transform_4(%arg0: i32) -> (i32, i32) {
    %c0_i32 = arith.constant 0 : i32
    %c0_i32_0 = arith.constant 0 : i32
    %c0_i32_1 = arith.constant 0 : i32
    return %c0_i32, %c0_i32_0 : i32, i32
  }
  func.func @transform_5(%arg0: i32) -> (i32, i32) {
    %c0_i32 = arith.constant 0 : i32
    %c0_i32_0 = arith.constant 0 : i32
    return %arg0, %c0_i32 : i32, i32
  }
}

module attributes {stable_mosaic.version = 11 : i64} {
  func.func @_bn2_bn3_add_relu_kernel(%arg0: i32, %arg1: memref<128x128xf32, #tpu.memory_space<vmem>>, %arg2: memref<1x128xf32, #tpu.memory_space<vmem>>, %arg3: memref<1x128xf32, #tpu.memory_space<vmem>>, %arg4: memref<1x128xf32, #tpu.memory_space<vmem>>, %arg5: memref<1x128xf32, #tpu.memory_space<vmem>>, %arg6: memref<128x128xf32, #tpu.memory_space<vmem>>, %arg7: memref<1x128xf32, #tpu.memory_space<vmem>>, %arg8: memref<1x128xf32, #tpu.memory_space<vmem>>, %arg9: memref<1x128xf32, #tpu.memory_space<vmem>>, %arg10: memref<1x128xf32, #tpu.memory_space<vmem>>, %arg11: memref<128x128xf32, #tpu.memory_space<vmem>>) attributes {dimension_semantics = [#tpu.dimension_semantics<parallel>], iteration_bounds = array<i64: 1>, scalar_prefetch = 0 : i64, scratch_operands = 0 : i64, tpu.core_type = #tpu.core_type<tc>, window_params = [{transform_indices = @transform_0, window_bounds = array<i64: 128, 128>}, {pipeline_mode = #tpu.pipeline_mode<synchronous>, transform_indices = @transform_1, window_bounds = array<i64: 1, 128>}, {pipeline_mode = #tpu.pipeline_mode<synchronous>, transform_indices = @transform_2, window_bounds = array<i64: 1, 128>}, {pipeline_mode = #tpu.pipeline_mode<synchronous>, transform_indices = @transform_3, window_bounds = array<i64: 1, 128>}, {pipeline_mode = #tpu.pipeline_mode<synchronous>, transform_indices = @transform_4, window_bounds = array<i64: 1, 128>}, {transform_indices = @transform_5, window_bounds = array<i64: 128, 128>}, {pipeline_mode = #tpu.pipeline_mode<synchronous>, transform_indices = @transform_6, window_bounds = array<i64: 1, 128>}, {pipeline_mode = #tpu.pipeline_mode<synchronous>, transform_indices = @transform_7, window_bounds = array<i64: 1, 128>}, {pipeline_mode = #tpu.pipeline_mode<synchronous>, transform_indices = @transform_8, window_bounds = array<i64: 1, 128>}, {pipeline_mode = #tpu.pipeline_mode<synchronous>, transform_indices = @transform_9, window_bounds = array<i64: 1, 128>}, {transform_indices = @transform_10, window_bounds = array<i64: 128, 128>}]} {
    %c0 = arith.constant 0 : index
    %c0_0 = arith.constant 0 : index
    %0 = vector.load %arg1[%c0, %c0_0] : memref<128x128xf32, #tpu.memory_space<vmem>>, vector<128x128xf32>
    %c0_1 = arith.constant 0 : index
    %c0_2 = arith.constant 0 : index
    %1 = vector.load %arg2[%c0_1, %c0_2] : memref<1x128xf32, #tpu.memory_space<vmem>>, vector<1x128xf32>
    %2 = vector.broadcast %1 : vector<1x128xf32> to vector<128x128xf32>
    %3 = arith.subf %0, %2 : vector<128x128xf32>
    %c0_3 = arith.constant 0 : index
    %c0_4 = arith.constant 0 : index
    %4 = vector.load %arg3[%c0_3, %c0_4] : memref<1x128xf32, #tpu.memory_space<vmem>>, vector<1x128xf32>
    %cst = arith.constant 9.99999974E-6 : f32
    %5 = vector.broadcast %cst : f32 to vector<1x128xf32>
    %6 = arith.addf %4, %5 : vector<1x128xf32>
    %7 = math.rsqrt %6 : vector<1x128xf32>
    %c0_5 = arith.constant 0 : index
    %c0_6 = arith.constant 0 : index
    %8 = vector.load %arg4[%c0_5, %c0_6] : memref<1x128xf32, #tpu.memory_space<vmem>>, vector<1x128xf32>
    %9 = arith.mulf %7, %8 : vector<1x128xf32>
    %10 = vector.broadcast %9 : vector<1x128xf32> to vector<128x128xf32>
    %11 = arith.mulf %3, %10 : vector<128x128xf32>
    %c0_7 = arith.constant 0 : index
    %c0_8 = arith.constant 0 : index
    %12 = vector.load %arg5[%c0_7, %c0_8] : memref<1x128xf32, #tpu.memory_space<vmem>>, vector<1x128xf32>
    %13 = vector.broadcast %12 : vector<1x128xf32> to vector<128x128xf32>
    %14 = arith.addf %11, %13 : vector<128x128xf32>
    %c0_9 = arith.constant 0 : index
    %c0_10 = arith.constant 0 : index
    %15 = vector.load %arg6[%c0_9, %c0_10] : memref<128x128xf32, #tpu.memory_space<vmem>>, vector<128x128xf32>
    %c0_11 = arith.constant 0 : index
    %c0_12 = arith.constant 0 : index
    %16 = vector.load %arg7[%c0_11, %c0_12] : memref<1x128xf32, #tpu.memory_space<vmem>>, vector<1x128xf32>
    %17 = vector.broadcast %16 : vector<1x128xf32> to vector<128x128xf32>
    %18 = arith.subf %15, %17 : vector<128x128xf32>
    %c0_13 = arith.constant 0 : index
    %c0_14 = arith.constant 0 : index
    %19 = vector.load %arg8[%c0_13, %c0_14] : memref<1x128xf32, #tpu.memory_space<vmem>>, vector<1x128xf32>
    %cst_15 = arith.constant 9.99999974E-6 : f32
    %20 = vector.broadcast %cst_15 : f32 to vector<1x128xf32>
    %21 = arith.addf %19, %20 : vector<1x128xf32>
    %22 = math.rsqrt %21 : vector<1x128xf32>
    %c0_16 = arith.constant 0 : index
    %c0_17 = arith.constant 0 : index
    %23 = vector.load %arg9[%c0_16, %c0_17] : memref<1x128xf32, #tpu.memory_space<vmem>>, vector<1x128xf32>
    %24 = arith.mulf %22, %23 : vector<1x128xf32>
    %25 = vector.broadcast %24 : vector<1x128xf32> to vector<128x128xf32>
    %26 = arith.mulf %18, %25 : vector<128x128xf32>
    %c0_18 = arith.constant 0 : index
    %c0_19 = arith.constant 0 : index
    %27 = vector.load %arg10[%c0_18, %c0_19] : memref<1x128xf32, #tpu.memory_space<vmem>>, vector<1x128xf32>
    %28 = vector.broadcast %27 : vector<1x128xf32> to vector<128x128xf32>
    %29 = arith.addf %26, %28 : vector<128x128xf32>
    %30 = arith.addf %14, %29 : vector<128x128xf32>
    %cst_20 = arith.constant 0.000000e+00 : f32
    %31 = vector.broadcast %cst_20 : f32 to vector<128x128xf32>
    %32 = arith.maximumf %30, %31 : vector<128x128xf32>
    %c0_21 = arith.constant 0 : index
    %c0_22 = arith.constant 0 : index
    %33 = vector.load %arg11[%c0_21, %c0_22] : memref<128x128xf32, #tpu.memory_space<vmem>>, vector<128x128xf32>
    tpu.vector_store %arg11[%c0_21, %c0_22], %32 {strides = array<i32>} : memref<128x128xf32, #tpu.memory_space<vmem>>, vector<128x128xf32>,
    return
  }
  func.func @transform_0(%arg0: i32) -> (i32, i32) {
    %c0_i32 = arith.constant 0 : i32
    %c0_i32_0 = arith.constant 0 : i32
    return %arg0, %c0_i32 : i32, i32
  }
  func.func @transform_1(%arg0: i32) -> (i32, i32) {
    %c0_i32 = arith.constant 0 : i32
    %c0_i32_0 = arith.constant 0 : i32
    %c0_i32_1 = arith.constant 0 : i32
    return %c0_i32, %c0_i32_0 : i32, i32
  }
  func.func @transform_2(%arg0: i32) -> (i32, i32) {
    %c0_i32 = arith.constant 0 : i32
    %c0_i32_0 = arith.constant 0 : i32
    %c0_i32_1 = arith.constant 0 : i32
    return %c0_i32, %c0_i32_0 : i32, i32
  }
  func.func @transform_3(%arg0: i32) -> (i32, i32) {
    %c0_i32 = arith.constant 0 : i32
    %c0_i32_0 = arith.constant 0 : i32
    %c0_i32_1 = arith.constant 0 : i32
    return %c0_i32, %c0_i32_0 : i32, i32
  }
  func.func @transform_4(%arg0: i32) -> (i32, i32) {
    %c0_i32 = arith.constant 0 : i32
    %c0_i32_0 = arith.constant 0 : i32
    %c0_i32_1 = arith.constant 0 : i32
    return %c0_i32, %c0_i32_0 : i32, i32
  }
  func.func @transform_5(%arg0: i32) -> (i32, i32) {
    %c0_i32 = arith.constant 0 : i32
    %c0_i32_0 = arith.constant 0 : i32
    return %arg0, %c0_i32 : i32, i32
  }
  func.func @transform_6(%arg0: i32) -> (i32, i32) {
    %c0_i32 = arith.constant 0 : i32
    %c0_i32_0 = arith.constant 0 : i32
    %c0_i32_1 = arith.constant 0 : i32
    return %c0_i32, %c0_i32_0 : i32, i32
  }
  func.func @transform_7(%arg0: i32) -> (i32, i32) {
    %c0_i32 = arith.constant 0 : i32
    %c0_i32_0 = arith.constant 0 : i32
    %c0_i32_1 = arith.constant 0 : i32
    return %c0_i32, %c0_i32_0 : i32, i32
  }
  func.func @transform_8(%arg0: i32) -> (i32, i32) {
    %c0_i32 = arith.constant 0 : i32
    %c0_i32_0 = arith.constant 0 : i32
    %c0_i32_1 = arith.constant 0 : i32
    return %c0_i32, %c0_i32_0 : i32, i32
  }
  func.func @transform_9(%arg0: i32) -> (i32, i32) {
    %c0_i32 = arith.constant 0 : i32
    %c0_i32_0 = arith.constant 0 : i32
    %c0_i32_1 = arith.constant 0 : i32
    return %c0_i32, %c0_i32_0 : i32, i32
  }
  func.func @transform_10(%arg0: i32) -> (i32, i32) {
    %c0_i32 = arith.constant 0 : i32
    %c0_i32_0 = arith.constant 0 : i32
    return %arg0, %c0_i32 : i32, i32
  }
}

module attributes {stable_mosaic.version = 11 : i64} {
  func.func @_conv_gemm_stats_kernel(%arg0: i32, %arg1: memref<128x72xbf16, #tpu.memory_space<vmem>>, %arg2: memref<72x128xbf16, #tpu.memory_space<vmem>>, %arg3: memref<128x128xf32, #tpu.memory_space<vmem>>, %arg4: memref<1x1x128xf32, #tpu.memory_space<vmem>>, %arg5: memref<1x1x128xf32, #tpu.memory_space<vmem>>) attributes {dimension_semantics = [#tpu.dimension_semantics<parallel>], iteration_bounds = array<i64: 1>, scalar_prefetch = 0 : i64, scratch_operands = 0 : i64, tpu.core_type = #tpu.core_type<tc>, window_params = [{transform_indices = @transform_0, window_bounds = array<i64: 128, 72>}, {pipeline_mode = #tpu.pipeline_mode<synchronous>, transform_indices = @transform_1, window_bounds = array<i64: 72, 128>}, {transform_indices = @transform_2, window_bounds = array<i64: 128, 128>}, {transform_indices = @transform_3, window_bounds = array<i64: 1, 1, 128>}, {transform_indices = @transform_4, window_bounds = array<i64: 1, 1, 128>}]} {
    %c0 = arith.constant 0 : index
    %c0_0 = arith.constant 0 : index
    %0 = vector.load %arg1[%c0, %c0_0] : memref<128x72xbf16, #tpu.memory_space<vmem>>, vector<128x72xbf16>
    %c0_1 = arith.constant 0 : index
    %c0_2 = arith.constant 0 : index
    %1 = vector.load %arg2[%c0_1, %c0_2] : memref<72x128xbf16, #tpu.memory_space<vmem>>, vector<72x128xbf16>
    %cst = arith.constant dense<0.000000e+00> : vector<128x128xf32>
    %2 = tpu.matmul %0, %1, %cst {dimension_numbers = #tpu.dot_dimension_numbers<[1], [0], [0], [1], [0, 0, 1, 1], [], []>} : vector<128x72xbf16>, vector<72x128xbf16>, vector<128x128xf32> -> vector<128x128xf32>
    %c0_3 = arith.constant 0 : index
    %c0_4 = arith.constant 0 : index
    %3 = vector.load %arg3[%c0_3, %c0_4] : memref<128x128xf32, #tpu.memory_space<vmem>>, vector<128x128xf32>
    tpu.vector_store %arg3[%c0_3, %c0_4], %2 {strides = array<i32>} : memref<128x128xf32, #tpu.memory_space<vmem>>, vector<128x128xf32>,
    %cst_5 = arith.constant dense<0.000000e+00> : vector<128xf32>
    %4 = vector.multi_reduction <add>, %2, %cst_5 [0] : vector<128x128xf32> to vector<128xf32>
    %5 = vector.shape_cast %4 : vector<128xf32> to vector<1x128xf32>
    %6 = vector.shape_cast %5 : vector<1x128xf32> to vector<1x1x128xf32>
    %c0_6 = arith.constant 0 : index
    %c0_7 = arith.constant 0 : index
    %c0_8 = arith.constant 0 : index
    %7 = vector.load %arg4[%c0_6, %c0_7, %c0_8] : memref<1x1x128xf32, #tpu.memory_space<vmem>>, vector<1x1x128xf32>
    tpu.vector_store %arg4[%c0_6, %c0_7, %c0_8], %6 {strides = array<i32>} : memref<1x1x128xf32, #tpu.memory_space<vmem>>, vector<1x1x128xf32>,
    %8 = arith.mulf %2, %2 : vector<128x128xf32>
    %cst_9 = arith.constant dense<0.000000e+00> : vector<128xf32>
    %9 = vector.multi_reduction <add>, %8, %cst_9 [0] : vector<128x128xf32> to vector<128xf32>
    %10 = vector.shape_cast %9 : vector<128xf32> to vector<1x128xf32>
    %11 = vector.shape_cast %10 : vector<1x128xf32> to vector<1x1x128xf32>
    %c0_10 = arith.constant 0 : index
    %c0_11 = arith.constant 0 : index
    %c0_12 = arith.constant 0 : index
    %12 = vector.load %arg5[%c0_10, %c0_11, %c0_12] : memref<1x1x128xf32, #tpu.memory_space<vmem>>, vector<1x1x128xf32>
    tpu.vector_store %arg5[%c0_10, %c0_11, %c0_12], %11 {strides = array<i32>} : memref<1x1x128xf32, #tpu.memory_space<vmem>>, vector<1x1x128xf32>,
    return
  }
  func.func @transform_0(%arg0: i32) -> (i32, i32) {
    %c0_i32 = arith.constant 0 : i32
    %c0_i32_0 = arith.constant 0 : i32
    return %arg0, %c0_i32 : i32, i32
  }
  func.func @transform_1(%arg0: i32) -> (i32, i32) {
    %c0_i32 = arith.constant 0 : i32
    %c0_i32_0 = arith.constant 0 : i32
    %c0_i32_1 = arith.constant 0 : i32
    return %c0_i32, %c0_i32_0 : i32, i32
  }
  func.func @transform_2(%arg0: i32) -> (i32, i32) {
    %c0_i32 = arith.constant 0 : i32
    %c0_i32_0 = arith.constant 0 : i32
    return %arg0, %c0_i32 : i32, i32
  }
  func.func @transform_3(%arg0: i32) -> (i32, i32, i32) {
    %c0_i32 = arith.constant 0 : i32
    %c0_i32_0 = arith.constant 0 : i32
    %c0_i32_1 = arith.constant 0 : i32
    return %arg0, %c0_i32, %c0_i32_0 : i32, i32, i32
  }
  func.func @transform_4(%arg0: i32) -> (i32, i32, i32) {
    %c0_i32 = arith.constant 0 : i32
    %c0_i32_0 = arith.constant 0 : i32
    %c0_i32_1 = arith.constant 0 : i32
    return %arg0, %c0_i32, %c0_i32_0 : i32, i32, i32
  }
}

</mosaic_0001>

<llo_original>
// kernel: basic_block.6
$region0: #{basic_block.6}
  #allocation0 [shape = 'u32[]', space=smem, size = 0x4, offset = 0x4, fixed_abs, tag = 'smem constant byte address 0x4 - core index']
  #allocation1 [shape = 'u32[144,128]{1,0:T(1,128)}', space=vmem, size = 0x12000, scoped, tag = 'internal scratch']
  %s0 = inlined_call_operand.vmem [shape: f32[128,128], index: 0, kind: input, shape index: {}]
  %s1 = inlined_call_operand.vmem [shape: f32[1,128], index: 1, kind: input, shape index: {}]
  %s2 = inlined_call_operand.vmem [shape: f32[1,128], index: 2, kind: input, shape index: {}]
  %s3 = inlined_call_operand.vmem [shape: f32[1,128], index: 3, kind: input, shape index: {}]
  %s4 = inlined_call_operand.vmem [shape: f32[1,128], index: 4, kind: input, shape index: {}]
  %s5 = inlined_call_operand.vmem [shape: f32[128,128], index: 5, kind: output, shape index: {}]
  %s6 = sld [smem:[#allocation0]]
  $region30: #{basic_block.6} parent=0
    _
  %s8 = ssub.s32 1, %s6
  %s9 = scalar_select 0, %s8, %s6
  // Predicated region
  $region2: #{basic_block.6} parent=0 // pred_check
    _
  $region3: #{basic_block.6} parent=0 // pred_check_branch
    %11 = sbr.rel (0) target = $region5
  $region4: #{basic_block.6} parent=0 // pred_region
    _
  $region5: #{basic_block.6} parent=0 // pred_fallthru
    _
  // Predicated region
  $region6: #{basic_block.6} parent=0 // pred_check
    _
  $region7: #{basic_block.6} parent=0 // pred_check_branch
    %13 = sbr.rel (0) target = $region9
  $region8: #{basic_block.6} parent=0 // pred_region
    _
  $region9: #{basic_block.6} parent=0 // pred_fallthru
    _
  // Predicated region
  $region10: #{basic_block.6} parent=0 // pred_check
    _
  $region11: #{basic_block.6} parent=0 // pred_check_branch
    %15 = sbr.rel (0) target = $region13
  $region12: #{basic_block.6} parent=0 // pred_region
    _
  $region13: #{basic_block.6} parent=0 // pred_fallthru
    _
  // Predicated region
  $region14: #{basic_block.6} parent=0 // pred_check
    _
  $region15: #{basic_block.6} parent=0 // pred_check_branch
    %17 = sbr.rel (0) target = $region17
  $region16: #{basic_block.6} parent=0 // pred_region
    _
  $region17: #{basic_block.6} parent=0 // pred_fallthru
    _
  // Predicated region
  $region18: #{basic_block.6} parent=0 // pred_check
    _
  $region19: #{basic_block.6} parent=0 // pred_check_branch
    %19 = sbr.rel (0) target = $region21
  $region20: #{basic_block.6} parent=0 // pred_region
    _
  $region21: #{basic_block.6} parent=0 // pred_fallthru
    _
  %v20 = vld [vmem:[%s2] sm:$0x1]
  %v21 = vadd.f32 %v20, 1e-05
  %v22 = vrsqrt.pop %v21
  %v23 = vld [vmem:[%s0] sm:$0xff]
  %v24 = vld [vmem:[%s0 + $0x8] sm:$0xff]
  %v25 = vld [vmem:[%s0 + $0x10] sm:$0xff]
  %v26 = vld [vmem:[%s0 + $0x18] sm:$0xff]
  %v27 = vld [vmem:[%s0 + $0x20] sm:$0xff]
  %v28 = vld [vmem:[%s0 + $0x28] sm:$0xff]
  %v29 = vld [vmem:[%s0 + $0x30] sm:$0xff]
  %v30 = vld [vmem:[%s0 + $0x38] sm:$0xff]
  %v31 = vld [vmem:[%s0 + $0x40] sm:$0xff]
  %v32 = vld [vmem:[%s0 + $0x48] sm:$0xff]
  %v33 = vld [vmem:[%s0 + $0x50] sm:$0xff]
  %v34 = vld [vmem:[%s0 + $0x58] sm:$0xff]
  %v35 = vld [vmem:[%s0 + $0x60] sm:$0xff]
  %v36 = vld [vmem:[%s0 + $0x68] sm:$0xff]
  %v37 = vld [vmem:[%s0 + $0x70] sm:$0xff]
  %v38 = vld [vmem:[%s0 + $0x78] sm:$0xff]
  %v39 = vld [vmem:[%s1] sm:$0x1]
  %v41 = vlaneseq
  %v42 = vshrl.u32 %v41, 7
  %v43 = vsub.s32 0, %v42
  %v44 = vrot.slane %v39, %v43
  %v46 = vsub.f32 %v23, %v44
  %v47 = vsub.f32 %v24, %v44
  %v48 = vsub.f32 %v25, %v44
  %v49 = vsub.f32 %v26, %v44
  %v50 = vsub.f32 %v27, %v44
  %v51 = vsub.f32 %v28, %v44
  %v52 = vsub.f32 %v29, %v44
  %v53 = vsub.f32 %v30, %v44
  %v54 = vsub.f32 %v31, %v44
  %v55 = vsub.f32 %v32, %v44
  %v56 = vsub.f32 %v33, %v44
  %v57 = vsub.f32 %v34, %v44
  %v58 = vsub.f32 %v35, %v44
  %v59 = vsub.f32 %v36, %v44
  %v60 = vsub.f32 %v37, %v44
  %v61 = vsub.f32 %v38, %v44
  %v62 = vld [vmem:[%s3] sm:$0x1]
  %v63 = vmul.f32 %v22, %v62
  %v65 = vlaneseq
  %v66 = vshrl.u32 %v65, 7
  %v67 = vsub.s32 0, %v66
  %v68 = vrot.slane %v63, %v67
  %v70 = vmul.f32 %v46, %v68
  %v71 = vmul.f32 %v47, %v68
  %v72 = vmul.f32 %v48, %v68
  %v73 = vmul.f32 %v49, %v68
  %v74 = vmul.f32 %v50, %v68
  %v75 = vmul.f32 %v51, %v68
  %v76 = vmul.f32 %v52, %v68
  %v77 = vmul.f32 %v53, %v68
  %v78 = vmul.f32 %v54, %v68
  %v79 = vmul.f32 %v55, %v68
  %v80 = vmul.f32 %v56, %v68
  %v81 = vmul.f32 %v57, %v68
  %v82 = vmul.f32 %v58, %v68
  %v83 = vmul.f32 %v59, %v68
  %v84 = vmul.f32 %v60, %v68
  %v85 = vmul.f32 %v61, %v68
  %v86 = vld [vmem:[%s4] sm:$0x1]
  %v88 = vlaneseq
  %v89 = vshrl.u32 %v88, 7
  %v90 = vsub.s32 0, %v89
  %v91 = vrot.slane %v86, %v90
  %v93 = vadd.f32 %v70, %v91
  %v94 = vadd.f32 %v71, %v91
  %v95 = vadd.f32 %v72, %v91
  %v96 = vadd.f32 %v73, %v91
  %v97 = vadd.f32 %v74, %v91
  %v98 = vadd.f32 %v75, %v91
  %v99 = vadd.f32 %v76, %v91
  %v100 = vadd.f32 %v77, %v91
  %v101 = vadd.f32 %v78, %v91
  %v102 = vadd.f32 %v79, %v91
  %v103 = vadd.f32 %v80, %v91
  %v104 = vadd.f32 %v81, %v91
  %v105 = vadd.f32 %v82, %v91
  %v106 = vadd.f32 %v83, %v91
  %v107 = vadd.f32 %v84, %v91
  %v108 = vadd.f32 %v85, %v91
  %v109 = vmax.f32 %v93, 0.0
  %v110 = vmax.f32 %v94, 0.0
  %v111 = vmax.f32 %v95, 0.0
  %v112 = vmax.f32 %v96, 0.0
  %v113 = vmax.f32 %v97, 0.0
  %v114 = vmax.f32 %v98, 0.0
  %v115 = vmax.f32 %v99, 0.0
  %v116 = vmax.f32 %v100, 0.0
  %v117 = vmax.f32 %v101, 0.0
  %v118 = vmax.f32 %v102, 0.0
  %v119 = vmax.f32 %v103, 0.0
  %v120 = vmax.f32 %v104, 0.0
  %v121 = vmax.f32 %v105, 0.0
  %v122 = vmax.f32 %v106, 0.0
  %v123 = vmax.f32 %v107, 0.0
  %v124 = vmax.f32 %v108, 0.0
  %125 = vst [vmem:[%s5] sm:$0xff] %v109
  %126 = vst [vmem:[%s5 + $0x8] sm:$0xff] %v110
  %127 = vst [vmem:[%s5 + $0x10] sm:$0xff] %v111
  %128 = vst [vmem:[%s5 + $0x18] sm:$0xff] %v112
  %129 = vst [vmem:[%s5 + $0x20] sm:$0xff] %v113
  %130 = vst [vmem:[%s5 + $0x28] sm:$0xff] %v114
  %131 = vst [vmem:[%s5 + $0x30] sm:$0xff] %v115
  %132 = vst [vmem:[%s5 + $0x38] sm:$0xff] %v116
  %133 = vst [vmem:[%s5 + $0x40] sm:$0xff] %v117
  %134 = vst [vmem:[%s5 + $0x48] sm:$0xff] %v118
  %135 = vst [vmem:[%s5 + $0x50] sm:$0xff] %v119
  %136 = vst [vmem:[%s5 + $0x58] sm:$0xff] %v120
  %137 = vst [vmem:[%s5 + $0x60] sm:$0xff] %v121
  %138 = vst [vmem:[%s5 + $0x68] sm:$0xff] %v122
  %139 = vst [vmem:[%s5 + $0x70] sm:$0xff] %v123
  %140 = vst [vmem:[%s5 + $0x78] sm:$0xff] %v124
  // Predicated region
  $region22: #{basic_block.6} parent=0 // pred_check
    _
  $region23: #{basic_block.6} parent=0 // pred_check_branch
    %142 = sbr.rel (0) target = $region25
  $region24: #{basic_block.6} parent=0 // pred_region
    _
  $region25: #{basic_block.6} parent=0 // pred_fallthru
    _
  // Predicated region
  $region26: #{basic_block.6} parent=0 // pred_check
    _
  $region27: #{basic_block.6} parent=0 // pred_check_branch
    %144 = sbr.rel (0) target = $region29
  $region28: #{basic_block.6} parent=0 // pred_region
    _
  $region29: #{basic_block.6} parent=0 // pred_fallthru
    _

// kernel: basic_block.5
$region0: #{basic_block.5}
  #allocation0 [shape = 'u32[]', space=smem, size = 0x4, offset = 0x4, fixed_abs, tag = 'smem constant byte address 0x4 - core index']
  #allocation1 [shape = 'u32[144,128]{1,0:T(1,128)}', space=vmem, size = 0x12000, scoped, tag = 'internal scratch']
  %s0 = inlined_call_operand.vmem [shape: bf16[128,36], index: 0, kind: input, shape index: {}]
  %s1 = inlined_call_operand.vmem [shape: bf16[36,128], index: 1, kind: input, shape index: {}]
  %s2 = inlined_call_operand.vmem [shape: f32[128,128], index: 2, kind: output, shape index: {0}]
  %s3 = inlined_call_operand.vmem [shape: f32[1,1,128], index: 3, kind: output, shape index: {1}]
  %s4 = inlined_call_operand.vmem [shape: f32[1,1,128], index: 4, kind: output, shape index: {2}]
  %5 = xla_tuple %s2, %s3, %s4
  %s6 = sld [smem:[#allocation0]]
  $region34: #{basic_block.5} parent=0
    _
  %s8 = ssub.s32 1, %s6
  %s9 = scalar_select 0, %s8, %s6
  // Predicated region
  $region2: #{basic_block.5} parent=0 // pred_check
    _
  $region3: #{basic_block.5} parent=0 // pred_check_branch
    %11 = sbr.rel (0) target = $region5
  $region4: #{basic_block.5} parent=0 // pred_region
    _
  $region5: #{basic_block.5} parent=0 // pred_fallthru
    _
  // Predicated region
  $region6: #{basic_block.5} parent=0 // pred_check
    _
  $region7: #{basic_block.5} parent=0 // pred_check_branch
    %13 = sbr.rel (0) target = $region9
  $region8: #{basic_block.5} parent=0 // pred_region
    _
  $region9: #{basic_block.5} parent=0 // pred_fallthru
    _
  %v15 = vld [vmem:[%s0] sm:$0xf]
  %v16 = vld [vmem:[%s0 + $0x4] sm:$0xf]
  %v17 = vld [vmem:[%s0 + $0x8] sm:$0xf]
  %v18 = vld [vmem:[%s0 + $0xc] sm:$0xf]
  %v19 = vld [vmem:[%s0 + $0x10] sm:$0xf]
  %v20 = vld [vmem:[%s0 + $0x14] sm:$0xf]
  %v21 = vld [vmem:[%s0 + $0x18] sm:$0xf]
  %v22 = vld [vmem:[%s0 + $0x1c] sm:$0xf]
  %v23 = vld [vmem:[%s0 + $0x20] sm:$0xf]
  %v24 = vld [vmem:[%s0 + $0x24] sm:$0xf]
  %v25 = vld [vmem:[%s0 + $0x28] sm:$0xf]
  %v26 = vld [vmem:[%s0 + $0x2c] sm:$0xf]
  %v27 = vld [vmem:[%s0 + $0x30] sm:$0xf]
  %v28 = vld [vmem:[%s0 + $0x34] sm:$0xf]
  %v29 = vld [vmem:[%s0 + $0x38] sm:$0xf]
  %v30 = vld [vmem:[%s0 + $0x3c] sm:$0xf]
  %v31 = vld [vmem:[%s1] sm:$0xf]
  %v32 = vld [vmem:[%s1 + $0x4] sm:$0xf]
  %v33 = vld [vmem:[%s1 + $0x8] sm:$0xf]
  %v34 = vld [vmem:[%s1 + $0xc] sm:$0xf]
  %v35 = vld [vmem:[%s1 + $0x10] sm:$0x3]
  %v52 = vunpack.c.l.b16 %v15
  %v53 = vunpack.c.l.b16 %v16
  %v54 = vunpack.c.l.b16 %v17
  %v55 = vunpack.c.l.b16 %v18
  %v56 = vunpack.c.l.b16 %v19
  %v57 = vunpack.c.l.b16 %v20
  %v58 = vunpack.c.l.b16 %v21
  %v59 = vunpack.c.l.b16 %v22
  %v60 = vunpack.c.l.b16 %v23
  %v61 = vunpack.c.l.b16 %v24
  %v62 = vunpack.c.l.b16 %v25
  %v63 = vunpack.c.l.b16 %v26
  %v64 = vunpack.c.l.b16 %v27
  %v65 = vunpack.c.l.b16 %v28
  %v66 = vunpack.c.l.b16 %v29
  %v67 = vunpack.c.l.b16 %v30
  %v68 = vpack.c.b16 %v53, %v52
  %v69 = vpack.c.b16 %v55, %v54
  %v70 = vpack.c.b16 %v57, %v56
  %v71 = vpack.c.b16 %v59, %v58
  %v72 = vpack.c.b16 %v61, %v60
  %v73 = vpack.c.b16 %v63, %v62
  %v74 = vpack.c.b16 %v65, %v64
  %v75 = vpack.c.b16 %v67, %v66
  %v81 = vunpack.c.l.b16 %v31
  %v82 = vunpack.c.l.b16 %v32
  %v83 = vunpack.c.l.b16 %v33
  %v84 = vunpack.c.l.b16 %v34
  %v85 = vunpack.c.l.b16 %v35
  %v86 = vpack.c.b16 %v82, %v81
  %v87 = vpack.c.b16 %v84, %v83
  %v88 = vpack.c.b16 %v85, %v85
  %vm91 = vcmask 293888
  %v93 = vsel %vm91, %v68, 0
  %v96 = vsel %vm91, %v69, 0
  %v99 = vsel %vm91, %v70, 0
  %v102 = vsel %vm91, %v71, 0
  %v105 = vsel %vm91, %v72, 0
  %v108 = vsel %vm91, %v73, 0
  %v111 = vsel %vm91, %v74, 0
  %v114 = vsel %vm91, %v75, 0
  %vm116 = vcmask 1041408
  %v118 = vsel %vm116, %v88, 0
  %120 = vmatprep.subr.bf16.mxu0 0
  %121 = vmatpush1.bf16.msra.mxu0 %v86
  %122 = vmatprep.subr.bf16.mxu0 0
  %123 = vmatpush1.bf16.msra.mxu0 %v87
  %124 = vmatprep.subr.bf16.mxu0 0
  %125 = vmatpush1.bf16.msra.mxu0 %v118
  %126 = vmatprep.subr.bf16.mxu0 0
  %127 = vmatpush1.bf16.msra.mxu0 0
  %128 = vmatprep.subr.bf16.mxu0 0
  %129 = vmatpush1.bf16.msra.mxu0 0
  %130 = vmatprep.subr.bf16.mxu0 0
  %131 = vmatpush1.bf16.msra.mxu0 0
  %132 = vmatprep.subr.bf16.mxu0 0
  %133 = vmatpush1.bf16.msra.mxu0 0
  %134 = vmatprep.subr.bf16.mxu0 0
  %135 = vmatpush1.bf16.msra.mxu0 0
  %136 = vmatprep.subr.bf16.mxu0 0
  %137 = vmatpush1.bf16.msra.mxu0 0
  %138 = vmatprep.subr.bf16.mxu0 0
  %139 = vmatpush1.bf16.msra.mxu0 0
  %140 = vmatprep.subr.bf16.mxu0 0
  %141 = vmatpush1.bf16.msra.mxu0 0
  %142 = vmatprep.subr.bf16.mxu0 0
  %143 = vmatpush1.bf16.msra.mxu0 0
  %144 = vmatprep.subr.bf16.mxu0 0
  %145 = vmatpush1.bf16.msra.mxu0 0
  %146 = vmatprep.subr.bf16.mxu0 0
  %147 = vmatpush1.bf16.msra.mxu0 0
  %148 = vmatprep.subr.bf16.mxu0 0
  %149 = vmatpush1.bf16.msra.mxu0 0
  %150 = vmatprep.subr.bf16.mxu0 0
  %151 = vmatpush1.bf16.msra.mxu0 0
  %152 = vmatprep.mubr.bf16.mxu0 0
  %153 = vmatmul.mubr.bf16.gmra.mrb[0].mxu0 %v93
  %v154 = vpop.f32.mrb[0].mxu0
  %v155 = vadd.f32 0.0, %v154
  %v156 = vpop.f32.mrb[0].mxu0
  %v157 = vpop.f32.mrb[0].mxu0
  %v158 = vadd.f32 0.0, %v157
  %v159 = vpop.f32.mrb[0].mxu0
  %160 = vmatprep.mubr.bf16.mxu0 0
  %161 = vmatmul.mubr.bf16.gmra.mrb[0].mxu0 %v96
  %v162 = vpop.f32.mrb[0].mxu0
  %v163 = vadd.f32 0.0, %v162
  %v164 = vpop.f32.mrb[0].mxu0
  %v165 = vpop.f32.mrb[0].mxu0
  %v166 = vadd.f32 0.0, %v165
  %v167 = vpop.f32.mrb[0].mxu0
  %168 = vmatprep.mubr.bf16.mxu0 0
  %169 = vmatmul.mubr.bf16.gmra.mrb[0].mxu0 %v99
  %v170 = vpop.f32.mrb[0].mxu0
  %v171 = vadd.f32 0.0, %v170
  %v172 = vpop.f32.mrb[0].mxu0
  %v173 = vpop.f32.mrb[0].mxu0
  %v174 = vadd.f32 0.0, %v173
  %v175 = vpop.f32.mrb[0].mxu0
  %176 = vmatprep.mubr.bf16.mxu0 0
  %177 = vmatmul.mubr.bf16.gmra.mrb[0].mxu0 %v102
  %v178 = vpop.f32.mrb[0].mxu0
  %v179 = vadd.f32 0.0, %v178
  %v180 = vpop.f32.mrb[0].mxu0
  %v181 = vpop.f32.mrb[0].mxu0
  %v182 = vadd.f32 0.0, %v181
  %v183 = vpop.f32.mrb[0].mxu0
  %184 = vmatprep.mubr.bf16.mxu0 0
  %185 = vmatmul.mubr.bf16.gmra.mrb[0].mxu0 %v105
  %v186 = vpop.f32.mrb[0].mxu0
  %v187 = vadd.f32 0.0, %v186
  %v188 = vpop.f32.mrb[0].mxu0
  %v189 = vpop.f32.mrb[0].mxu0
  %v190 = vadd.f32 0.0, %v189
  %v191 = vpop.f32.mrb[0].mxu0
  %192 = vmatprep.mubr.bf16.mxu0 0
  %193 = vmatmul.mubr.bf16.gmra.mrb[0].mxu0 %v108
  %v194 = vpop.f32.mrb[0].mxu0
  %v195 = vadd.f32 0.0, %v194
  %v196 = vpop.f32.mrb[0].mxu0
  %v197 = vpop.f32.mrb[0].mxu0
  %v198 = vadd.f32 0.0, %v197
  %v199 = vpop.f32.mrb[0].mxu0
  %200 = vmatprep.mubr.bf16.mxu0 0
  %201 = vmatmul.mubr.bf16.gmra.mrb[0].mxu0 %v111
  %v202 = vpop.f32.mrb[0].mxu0
  %v203 = vadd.f32 0.0, %v202
  %v204 = vpop.f32.mrb[0].mxu0
  %v205 = vpop.f32.mrb[0].mxu0
  %v206 = vadd.f32 0.0, %v205
  %v207 = vpop.f32.mrb[0].mxu0
  %208 = vmatprep.mubr.bf16.mxu0 0
  %209 = vmatmul.mubr.bf16.gmra.mrb[0].mxu0 %v114
  %v210 = vpop.f32.mrb[0].mxu0
  %v211 = vadd.f32 0.0, %v210
  %v212 = vpop.f32.mrb[0].mxu0
  %v213 = vpop.f32.mrb[0].mxu0
  %v214 = vadd.f32 0.0, %v213
  %v215 = vpop.f32.mrb[0].mxu0
  %216 = vdwg.mxu0
  %217 = vst [vmem:[%s2] sm:$0xff] %v155
  %218 = vst [vmem:[%s2 + $0x8] sm:$0xff] %v158
  %219 = vst [vmem:[%s2 + $0x10] sm:$0xff] %v163
  %220 = vst [vmem:[%s2 + $0x18] sm:$0xff] %v166
  %221 = vst [vmem:[%s2 + $0x20] sm:$0xff] %v171
  %222 = vst [vmem:[%s2 + $0x28] sm:$0xff] %v174
  %223 = vst [vmem:[%s2 + $0x30] sm:$0xff] %v179
  %224 = vst [vmem:[%s2 + $0x38] sm:$0xff] %v182
  %225 = vst [vmem:[%s2 + $0x40] sm:$0xff] %v187
  %226 = vst [vmem:[%s2 + $0x48] sm:$0xff] %v190
  %227 = vst [vmem:[%s2 + $0x50] sm:$0xff] %v195
  %228 = vst [vmem:[%s2 + $0x58] sm:$0xff] %v198
  %229 = vst [vmem:[%s2 + $0x60] sm:$0xff] %v203
  %230 = vst [vmem:[%s2 + $0x68] sm:$0xff] %v206
  %231 = vst [vmem:[%s2 + $0x70] sm:$0xff] %v211
  %232 = vst [vmem:[%s2 + $0x78] sm:$0xff] %v214
  %v233 = vadd.f32 %v155, %v158
  %v234 = vadd.f32 %v233, %v163
  %v235 = vadd.f32 %v234, %v166
  %v236 = vadd.f32 %v235, %v171
  %v237 = vadd.f32 %v236, %v174
  %v238 = vadd.f32 %v237, %v179
  %v239 = vadd.f32 %v238, %v182
  %v240 = vadd.f32 %v239, %v187
  %v241 = vadd.f32 %v240, %v190
  %v242 = vadd.f32 %v241, %v195
  %v243 = vadd.f32 %v242, %v198
  %v244 = vadd.f32 %v243, %v203
  %v245 = vadd.f32 %v244, %v206
  %v246 = vadd.f32 %v245, %v211
  %v247 = vadd.f32 %v246, %v214
  %v248 = vrot.slane %v247, 4
  %v249 = vadd.f32 %v247, %v248
  %v250 = vrot.slane %v249, 2
  %v251 = vadd.f32 %v249, %v250
  %v252 = vrot.slane %v251, 1
  %v253 = vadd.f32 %v251, %v252
  %254 = vst [vmem:[%s3] sm:$0x1] %v253
  %v255 = vmul.f32 %v155, %v155
  %v256 = vmul.f32 %v158, %v158
  %v257 = vmul.f32 %v163, %v163
  %v258 = vmul.f32 %v166, %v166
  %v259 = vmul.f32 %v171, %v171
  %v260 = vmul.f32 %v174, %v174
  %v261 = vmul.f32 %v179, %v179
  %v262 = vmul.f32 %v182, %v182
  %v263 = vmul.f32 %v187, %v187
  %v264 = vmul.f32 %v190, %v190
  %v265 = vmul.f32 %v195, %v195
  %v266 = vmul.f32 %v198, %v198
  %v267 = vmul.f32 %v203, %v203
  %v268 = vmul.f32 %v206, %v206
  %v269 = vmul.f32 %v211, %v211
  %v270 = vmul.f32 %v214, %v214
  %v271 = vadd.f32 %v255, %v256
  %v272 = vadd.f32 %v271, %v257
  %v273 = vadd.f32 %v272, %v258
  %v274 = vadd.f32 %v273, %v259
  %v275 = vadd.f32 %v274, %v260
  %v276 = vadd.f32 %v275, %v261
  %v277 = vadd.f32 %v276, %v262
  %v278 = vadd.f32 %v277, %v263
  %v279 = vadd.f32 %v278, %v264
  %v280 = vadd.f32 %v279, %v265
  %v281 = vadd.f32 %v280, %v266
  %v282 = vadd.f32 %v281, %v267
  %v283 = vadd.f32 %v282, %v268
  %v284 = vadd.f32 %v283, %v269
  %v285 = vadd.f32 %v284, %v270
  %v286 = vrot.slane %v285, 4
  %v287 = vadd.f32 %v285, %v286
  %v288 = vrot.slane %v287, 2
  %v289 = vadd.f32 %v287, %v288
  %v290 = vrot.slane %v289, 1
  %v291 = vadd.f32 %v289, %v290
  %292 = vst [vmem:[%s4] sm:$0x1] %v291
  // Predicated region
  $region10: #{basic_block.5} parent=0 // pred_check
    _
  $region11: #{basic_block.5} parent=0 // pred_check_branch
    %294 = sbr.rel (0) target = $region13
  $region12: #{basic_block.5} parent=0 // pred_region
    _
  $region13: #{basic_block.5} parent=0 // pred_fallthru
    _
  // Predicated region
  $region14: #{basic_block.5} parent=0 // pred_check
    _
  $region15: #{basic_block.5} parent=0 // pred_check_branch
    %296 = sbr.rel (0) target = $region17
  $region16: #{basic_block.5} parent=0 // pred_region
    _
  $region17: #{basic_block.5} parent=0 // pred_fallthru
    _
  // Predicated region
  $region18: #{basic_block.5} parent=0 // pred_check
    _
  $region19: #{basic_block.5} parent=0 // pred_check_branch
    %298 = sbr.rel (0) target = $region21
  $region20: #{basic_block.5} parent=0 // pred_region
    _
  $region21: #{basic_block.5} parent=0 // pred_fallthru
    _
  // Predicated region
  $region22: #{basic_block.5} parent=0 // pred_check
    _
  $region23: #{basic_block.5} parent=0 // pred_check_branch
    %300 = sbr.rel (0) target = $region25
  $region24: #{basic_block.5} parent=0 // pred_region
    _
  $region25: #{basic_block.5} parent=0 // pred_fallthru
    _
  // Predicated region
  $region26: #{basic_block.5} parent=0 // pred_check
    _
  $region27: #{basic_block.5} parent=0 // pred_check_branch
    %302 = sbr.rel (0) target = $region29
  $region28: #{basic_block.5} parent=0 // pred_region
    _
  $region29: #{basic_block.5} parent=0 // pred_fallthru
    _
  // Predicated region
  $region30: #{basic_block.5} parent=0 // pred_check
    _
  $region31: #{basic_block.5} parent=0 // pred_check_branch
    %304 = sbr.rel (0) target = $region33
  $region32: #{basic_block.5} parent=0 // pred_region
    _
  $region33: #{basic_block.5} parent=0 // pred_fallthru
    _

// kernel: basic_block.9
$region0: #{basic_block.9}
  #allocation0 [shape = 'u32[]', space=smem, size = 0x4, offset = 0x4, fixed_abs, tag = 'smem constant byte address 0x4 - core index']
  #allocation1 [shape = 'u32[144,128]{1,0:T(1,128)}', space=vmem, size = 0x12000, scoped, tag = 'internal scratch']
  %s0 = inlined_call_operand.vmem [shape: f32[128,128], index: 0, kind: input, shape index: {}]
  %s1 = inlined_call_operand.vmem [shape: f32[1,128], index: 1, kind: input, shape index: {}]
  %s2 = inlined_call_operand.vmem [shape: f32[1,128], index: 2, kind: input, shape index: {}]
  %s3 = inlined_call_operand.vmem [shape: f32[1,128], index: 3, kind: input, shape index: {}]
  %s4 = inlined_call_operand.vmem [shape: f32[1,128], index: 4, kind: input, shape index: {}]
  %s5 = inlined_call_operand.vmem [shape: f32[128,128], index: 5, kind: input, shape index: {}]
  %s6 = inlined_call_operand.vmem [shape: f32[1,128], index: 6, kind: input, shape index: {}]
  %s7 = inlined_call_operand.vmem [shape: f32[1,128], index: 7, kind: input, shape index: {}]
  %s8 = inlined_call_operand.vmem [shape: f32[1,128], index: 8, kind: input, shape index: {}]
  %s9 = inlined_call_operand.vmem [shape: f32[1,128], index: 9, kind: input, shape index: {}]
  %s10 = inlined_call_operand.vmem [shape: f32[128,128], index: 10, kind: output, shape index: {}]
  %s11 = sld [smem:[#allocation0]]
  $region50: #{basic_block.9} parent=0
    _
  %s13 = ssub.s32 1, %s11
  %s14 = scalar_select 0, %s13, %s11
  // Predicated region
  $region2: #{basic_block.9} parent=0 // pred_check
    _
  $region3: #{basic_block.9} parent=0 // pred_check_branch
    %16 = sbr.rel (0) target = $region5
  $region4: #{basic_block.9} parent=0 // pred_region
    _
  $region5: #{basic_block.9} parent=0 // pred_fallthru
    _
  // Predicated region
  $region6: #{basic_block.9} parent=0 // pred_check
    _
  $region7: #{basic_block.9} parent=0 // pred_check_branch
    %18 = sbr.rel (0) target = $region9
  $region8: #{basic_block.9} parent=0 // pred_region
    _
  $region9: #{basic_block.9} parent=0 // pred_fallthru
    _
  // Predicated region
  $region10: #{basic_block.9} parent=0 // pred_check
    _
  $region11: #{basic_block.9} parent=0 // pred_check_branch
    %20 = sbr.rel (0) target = $region13
  $region12: #{basic_block.9} parent=0 // pred_region
    _
  $region13: #{basic_block.9} parent=0 // pred_fallthru
    _
  // Predicated region
  $region14: #{basic_block.9} parent=0 // pred_check
    _
  $region15: #{basic_block.9} parent=0 // pred_check_branch
    %22 = sbr.rel (0) target = $region17
  $region16: #{basic_block.9} parent=0 // pred_region
    _
  $region17: #{basic_block.9} parent=0 // pred_fallthru
    _
  // Predicated region
  $region18: #{basic_block.9} parent=0 // pred_check
    _
  $region19: #{basic_block.9} parent=0 // pred_check_branch
    %24 = sbr.rel (0) target = $region21
  $region20: #{basic_block.9} parent=0 // pred_region
    _
  $region21: #{basic_block.9} parent=0 // pred_fallthru
    _
  // Predicated region
  $region22: #{basic_block.9} parent=0 // pred_check
    _
  $region23: #{basic_block.9} parent=0 // pred_check_branch
    %26 = sbr.rel (0) target = $region25
  $region24: #{basic_block.9} parent=0 // pred_region
    _
  $region25: #{basic_block.9} parent=0 // pred_fallthru
    _
  // Predicated region
  $region26: #{basic_block.9} parent=0 // pred_check
    _
  $region27: #{basic_block.9} parent=0 // pred_check_branch
    %28 = sbr.rel (0) target = $region29
  $region28: #{basic_block.9} parent=0 // pred_region
    _
  $region29: #{basic_block.9} parent=0 // pred_fallthru
    _
  // Predicated region
  $region30: #{basic_block.9} parent=0 // pred_check
    _
  $region31: #{basic_block.9} parent=0 // pred_check_branch
    %30 = sbr.rel (0) target = $region33
  $region32: #{basic_block.9} parent=0 // pred_region
    _
  $region33: #{basic_block.9} parent=0 // pred_fallthru
    _
  // Predicated region
  $region34: #{basic_block.9} parent=0 // pred_check
    _
  $region35: #{basic_block.9} parent=0 // pred_check_branch
    %32 = sbr.rel (0) target = $region37
  $region36: #{basic_block.9} parent=0 // pred_region
    _
  $region37: #{basic_block.9} parent=0 // pred_fallthru
    _
  // Predicated region
  $region38: #{basic_block.9} parent=0 // pred_check
    _
  $region39: #{basic_block.9} parent=0 // pred_check_branch
    %34 = sbr.rel (0) target = $region41
  $region40: #{basic_block.9} parent=0 // pred_region
    _
  $region41: #{basic_block.9} parent=0 // pred_fallthru
    _
  %v35 = vld [vmem:[%s0] sm:$0xff]
  %v36 = vld [vmem:[%s0 + $0x8] sm:$0xff]
  %v37 = vld [vmem:[%s0 + $0x10] sm:$0xff]
  %v38 = vld [vmem:[%s0 + $0x18] sm:$0xff]
  %v39 = vld [vmem:[%s0 + $0x20] sm:$0xff]
  %v40 = vld [vmem:[%s0 + $0x28] sm:$0xff]
  %v41 = vld [vmem:[%s0 + $0x30] sm:$0xff]
  %v42 = vld [vmem:[%s0 + $0x38] sm:$0xff]
  %v43 = vld [vmem:[%s0 + $0x40] sm:$0xff]
  %v44 = vld [vmem:[%s0 + $0x48] sm:$0xff]
  %v45 = vld [vmem:[%s0 + $0x50] sm:$0xff]
  %v46 = vld [vmem:[%s0 + $0x58] sm:$0xff]
  %v47 = vld [vmem:[%s0 + $0x60] sm:$0xff]
  %v48 = vld [vmem:[%s0 + $0x68] sm:$0xff]
  %v49 = vld [vmem:[%s0 + $0x70] sm:$0xff]
  %v50 = vld [vmem:[%s0 + $0x78] sm:$0xff]
  %v51 = vld [vmem:[%s1] sm:$0x1]
  %v53 = vlaneseq
  %v54 = vshrl.u32 %v53, 7
  %v55 = vsub.s32 0, %v54
  %v56 = vrot.slane %v51, %v55
  %v58 = vsub.f32 %v35, %v56
  %v59 = vsub.f32 %v36, %v56
  %v60 = vsub.f32 %v37, %v56
  %v61 = vsub.f32 %v38, %v56
  %v62 = vsub.f32 %v39, %v56
  %v63 = vsub.f32 %v40, %v56
  %v64 = vsub.f32 %v41, %v56
  %v65 = vsub.f32 %v42, %v56
  %v66 = vsub.f32 %v43, %v56
  %v67 = vsub.f32 %v44, %v56
  %v68 = vsub.f32 %v45, %v56
  %v69 = vsub.f32 %v46, %v56
  %v70 = vsub.f32 %v47, %v56
  %v71 = vsub.f32 %v48, %v56
  %v72 = vsub.f32 %v49, %v56
  %v73 = vsub.f32 %v50, %v56
  %v74 = vld [vmem:[%s2] sm:$0x1]
  %v75 = vadd.f32 %v74, 1e-05
  %v76 = vrsqrt.pop %v75
  %v77 = vld [vmem:[%s3] sm:$0x1]
  %v78 = vmul.f32 %v76, %v77
  %v80 = vlaneseq
  %v81 = vshrl.u32 %v80, 7
  %v82 = vsub.s32 0, %v81
  %v83 = vrot.slane %v78, %v82
  %v85 = vmul.f32 %v58, %v83
  %v86 = vmul.f32 %v59, %v83
  %v87 = vmul.f32 %v60, %v83
  %v88 = vmul.f32 %v61, %v83
  %v89 = vmul.f32 %v62, %v83
  %v90 = vmul.f32 %v63, %v83
  %v91 = vmul.f32 %v64, %v83
  %v92 = vmul.f32 %v65, %v83
  %v93 = vmul.f32 %v66, %v83
  %v94 = vmul.f32 %v67, %v83
  %v95 = vmul.f32 %v68, %v83
  %v96 = vmul.f32 %v69, %v83
  %v97 = vmul.f32 %v70, %v83
  %v98 = vmul.f32 %v71, %v83
  %v99 = vmul.f32 %v72, %v83
  %v100 = vmul.f32 %v73, %v83
  %v101 = vld [vmem:[%s4] sm:$0x1]
  %v103 = vlaneseq
  %v104 = vshrl.u32 %v103, 7
  %v105 = vsub.s32 0, %v104
  %v106 = vrot.slane %v101, %v105
  %v108 = vadd.f32 %v85, %v106
  %v109 = vadd.f32 %v86, %v106
  %v110 = vadd.f32 %v87, %v106
  %v111 = vadd.f32 %v88, %v106
  %v112 = vadd.f32 %v89, %v106
  %v113 = vadd.f32 %v90, %v106
  %v114 = vadd.f32 %v91, %v106
  %v115 = vadd.f32 %v92, %v106
  %v116 = vadd.f32 %v93, %v106
  %v117 = vadd.f32 %v94, %v106
  %v118 = vadd.f32 %v95, %v106
  %v119 = vadd.f32 %v96, %v106
  %v120 = vadd.f32 %v97, %v106
  %v121 = vadd.f32 %v98, %v106
  %v122 = vadd.f32 %v99, %v106
  %v123 = vadd.f32 %v100, %v106
  %v124 = vld [vmem:[%s5] sm:$0xff]
  %v125 = vld [vmem:[%s5 + $0x8] sm:$0xff]
  %v126 = vld [vmem:[%s5 + $0x10] sm:$0xff]
  %v127 = vld [vmem:[%s5 + $0x18] sm:$0xff]
  %v128 = vld [vmem:[%s5 + $0x20] sm:$0xff]
  %v129 = vld [vmem:[%s5 + $0x28] sm:$0xff]
  %v130 = vld [vmem:[%s5 + $0x30] sm:$0xff]
  %v131 = vld [vmem:[%s5 + $0x38] sm:$0xff]
  %v132 = vld [vmem:[%s5 + $0x40] sm:$0xff]
  %v133 = vld [vmem:[%s5 + $0x48] sm:$0xff]
  %v134 = vld [vmem:[%s5 + $0x50] sm:$0xff]
  %v135 = vld [vmem:[%s5 + $0x58] sm:$0xff]
  %v136 = vld [vmem:[%s5 + $0x60] sm:$0xff]
  %v137 = vld [vmem:[%s5 + $0x68] sm:$0xff]
  %v138 = vld [vmem:[%s5 + $0x70] sm:$0xff]
  %v139 = vld [vmem:[%s5 + $0x78] sm:$0xff]
  %v140 = vld [vmem:[%s6] sm:$0x1]
  %v142 = vlaneseq
  %v143 = vshrl.u32 %v142, 7
  %v144 = vsub.s32 0, %v143
  %v145 = vrot.slane %v140, %v144
  %v147 = vsub.f32 %v124, %v145
  %v148 = vsub.f32 %v125, %v145
  %v149 = vsub.f32 %v126, %v145
  %v150 = vsub.f32 %v127, %v145
  %v151 = vsub.f32 %v128, %v145
  %v152 = vsub.f32 %v129, %v145
  %v153 = vsub.f32 %v130, %v145
  %v154 = vsub.f32 %v131, %v145
  %v155 = vsub.f32 %v132, %v145
  %v156 = vsub.f32 %v133, %v145
  %v157 = vsub.f32 %v134, %v145
  %v158 = vsub.f32 %v135, %v145
  %v159 = vsub.f32 %v136, %v145
  %v160 = vsub.f32 %v137, %v145
  %v161 = vsub.f32 %v138, %v145
  %v162 = vsub.f32 %v139, %v145
  %v163 = vld [vmem:[%s7] sm:$0x1]
  %v164 = vadd.f32 %v163, 1e-05
  %v165 = vrsqrt.pop %v164
  %v166 = vld [vmem:[%s8] sm:$0x1]
  %v167 = vmul.f32 %v165, %v166
  %v169 = vlaneseq
  %v170 = vshrl.u32 %v169, 7
  %v171 = vsub.s32 0, %v170
  %v172 = vrot.slane %v167, %v171
  %v174 = vmul.f32 %v147, %v172
  %v175 = vmul.f32 %v148, %v172
  %v176 = vmul.f32 %v149, %v172
  %v177 = vmul.f32 %v150, %v172
  %v178 = vmul.f32 %v151, %v172
  %v179 = vmul.f32 %v152, %v172
  %v180 = vmul.f32 %v153, %v172
  %v181 = vmul.f32 %v154, %v172
  %v182 = vmul.f32 %v155, %v172
  %v183 = vmul.f32 %v156, %v172
  %v184 = vmul.f32 %v157, %v172
  %v185 = vmul.f32 %v158, %v172
  %v186 = vmul.f32 %v159, %v172
  %v187 = vmul.f32 %v160, %v172
  %v188 = vmul.f32 %v161, %v172
  %v189 = vmul.f32 %v162, %v172
  %v190 = vld [vmem:[%s9] sm:$0x1]
  %v192 = vlaneseq
  %v193 = vshrl.u32 %v192, 7
  %v194 = vsub.s32 0, %v193
  %v195 = vrot.slane %v190, %v194
  %v197 = vadd.f32 %v174, %v195
  %v198 = vadd.f32 %v175, %v195
  %v199 = vadd.f32 %v176, %v195
  %v200 = vadd.f32 %v177, %v195
  %v201 = vadd.f32 %v178, %v195
  %v202 = vadd.f32 %v179, %v195
  %v203 = vadd.f32 %v180, %v195
  %v204 = vadd.f32 %v181, %v195
  %v205 = vadd.f32 %v182, %v195
  %v206 = vadd.f32 %v183, %v195
  %v207 = vadd.f32 %v184, %v195
  %v208 = vadd.f32 %v185, %v195
  %v209 = vadd.f32 %v186, %v195
  %v210 = vadd.f32 %v187, %v195
  %v211 = vadd.f32 %v188, %v195
  %v212 = vadd.f32 %v189, %v195
  %v213 = vadd.f32 %v108, %v197
  %v214 = vadd.f32 %v109, %v198
  %v215 = vadd.f32 %v110, %v199
  %v216 = vadd.f32 %v111, %v200
  %v217 = vadd.f32 %v112, %v201
  %v218 = vadd.f32 %v113, %v202
  %v219 = vadd.f32 %v114, %v203
  %v220 = vadd.f32 %v115, %v204
  %v221 = vadd.f32 %v116, %v205
  %v222 = vadd.f32 %v117, %v206
  %v223 = vadd.f32 %v118, %v207
  %v224 = vadd.f32 %v119, %v208
  %v225 = vadd.f32 %v120, %v209
  %v226 = vadd.f32 %v121, %v210
  %v227 = vadd.f32 %v122, %v211
  %v228 = vadd.f32 %v123, %v212
  %v229 = vmax.f32 %v213, 0.0
  %v230 = vmax.f32 %v214, 0.0
  %v231 = vmax.f32 %v215, 0.0
  %v232 = vmax.f32 %v216, 0.0
  %v233 = vmax.f32 %v217, 0.0
  %v234 = vmax.f32 %v218, 0.0
  %v235 = vmax.f32 %v219, 0.0
  %v236 = vmax.f32 %v220, 0.0
  %v237 = vmax.f32 %v221, 0.0
  %v238 = vmax.f32 %v222, 0.0
  %v239 = vmax.f32 %v223, 0.0
  %v240 = vmax.f32 %v224, 0.0
  %v241 = vmax.f32 %v225, 0.0
  %v242 = vmax.f32 %v226, 0.0
  %v243 = vmax.f32 %v227, 0.0
  %v244 = vmax.f32 %v228, 0.0
  %245 = vst [vmem:[%s10] sm:$0xff] %v229
  %246 = vst [vmem:[%s10 + $0x8] sm:$0xff] %v230
  %247 = vst [vmem:[%s10 + $0x10] sm:$0xff] %v231
  %248 = vst [vmem:[%s10 + $0x18] sm:$0xff] %v232
  %249 = vst [vmem:[%s10 + $0x20] sm:$0xff] %v233
  %250 = vst [vmem:[%s10 + $0x28] sm:$0xff] %v234
  %251 = vst [vmem:[%s10 + $0x30] sm:$0xff] %v235
  %252 = vst [vmem:[%s10 + $0x38] sm:$0xff] %v236
  %253 = vst [vmem:[%s10 + $0x40] sm:$0xff] %v237
  %254 = vst [vmem:[%s10 + $0x48] sm:$0xff] %v238
  %255 = vst [vmem:[%s10 + $0x50] sm:$0xff] %v239
  %256 = vst [vmem:[%s10 + $0x58] sm:$0xff] %v240
  %257 = vst [vmem:[%s10 + $0x60] sm:$0xff] %v241
  %258 = vst [vmem:[%s10 + $0x68] sm:$0xff] %v242
  %259 = vst [vmem:[%s10 + $0x70] sm:$0xff] %v243
  %260 = vst [vmem:[%s10 + $0x78] sm:$0xff] %v244
  // Predicated region
  $region42: #{basic_block.9} parent=0 // pred_check
    _
  $region43: #{basic_block.9} parent=0 // pred_check_branch
    %262 = sbr.rel (0) target = $region45
  $region44: #{basic_block.9} parent=0 // pred_region
    _
  $region45: #{basic_block.9} parent=0 // pred_fallthru
    _
  // Predicated region
  $region46: #{basic_block.9} parent=0 // pred_check
    _
  $region47: #{basic_block.9} parent=0 // pred_check_branch
    %264 = sbr.rel (0) target = $region49
  $region48: #{basic_block.9} parent=0 // pred_region
    _
  $region49: #{basic_block.9} parent=0 // pred_fallthru
    _

// kernel: basic_block.7
$region0: #{basic_block.7}
  #allocation0 [shape = 'u32[]', space=smem, size = 0x4, offset = 0x4, fixed_abs, tag = 'smem constant byte address 0x4 - core index']
  #allocation1 [shape = 'u32[144,128]{1,0:T(1,128)}', space=vmem, size = 0x12000, scoped, tag = 'internal scratch']
  %s0 = inlined_call_operand.vmem [shape: bf16[128,72], index: 0, kind: input, shape index: {}]
  %s1 = inlined_call_operand.vmem [shape: bf16[72,128], index: 1, kind: input, shape index: {}]
  %s2 = inlined_call_operand.vmem [shape: f32[128,128], index: 2, kind: output, shape index: {0}]
  %s3 = inlined_call_operand.vmem [shape: f32[1,1,128], index: 3, kind: output, shape index: {1}]
  %s4 = inlined_call_operand.vmem [shape: f32[1,1,128], index: 4, kind: output, shape index: {2}]
  %5 = xla_tuple %s2, %s3, %s4
  %s6 = sld [smem:[#allocation0]]
  $region34: #{basic_block.7} parent=0
    _
  %s8 = ssub.s32 1, %s6
  %s9 = scalar_select 0, %s8, %s6
  // Predicated region
  $region2: #{basic_block.7} parent=0 // pred_check
    _
  $region3: #{basic_block.7} parent=0 // pred_check_branch
    %11 = sbr.rel (0) target = $region5
  $region4: #{basic_block.7} parent=0 // pred_region
    _
  $region5: #{basic_block.7} parent=0 // pred_fallthru
    _
  // Predicated region
  $region6: #{basic_block.7} parent=0 // pred_check
    _
  $region7: #{basic_block.7} parent=0 // pred_check_branch
    %13 = sbr.rel (0) target = $region9
  $region8: #{basic_block.7} parent=0 // pred_region
    _
  $region9: #{basic_block.7} parent=0 // pred_fallthru
    _
  %v15 = vld [vmem:[%s0] sm:$0xf]
  %v16 = vld [vmem:[%s0 + $0x4] sm:$0xf]
  %v17 = vld [vmem:[%s0 + $0x8] sm:$0xf]
  %v18 = vld [vmem:[%s0 + $0xc] sm:$0xf]
  %v19 = vld [vmem:[%s0 + $0x10] sm:$0xf]
  %v20 = vld [vmem:[%s0 + $0x14] sm:$0xf]
  %v21 = vld [vmem:[%s0 + $0x18] sm:$0xf]
  %v22 = vld [vmem:[%s0 + $0x1c] sm:$0xf]
  %v23 = vld [vmem:[%s0 + $0x20] sm:$0xf]
  %v24 = vld [vmem:[%s0 + $0x24] sm:$0xf]
  %v25 = vld [vmem:[%s0 + $0x28] sm:$0xf]
  %v26 = vld [vmem:[%s0 + $0x2c] sm:$0xf]
  %v27 = vld [vmem:[%s0 + $0x30] sm:$0xf]
  %v28 = vld [vmem:[%s0 + $0x34] sm:$0xf]
  %v29 = vld [vmem:[%s0 + $0x38] sm:$0xf]
  %v30 = vld [vmem:[%s0 + $0x3c] sm:$0xf]
  %v31 = vld [vmem:[%s1] sm:$0xf]
  %v32 = vld [vmem:[%s1 + $0x4] sm:$0xf]
  %v33 = vld [vmem:[%s1 + $0x8] sm:$0xf]
  %v34 = vld [vmem:[%s1 + $0xc] sm:$0xf]
  %v35 = vld [vmem:[%s1 + $0x10] sm:$0xf]
  %v36 = vld [vmem:[%s1 + $0x14] sm:$0xf]
  %v37 = vld [vmem:[%s1 + $0x18] sm:$0xf]
  %v38 = vld [vmem:[%s1 + $0x1c] sm:$0xf]
  %v39 = vld [vmem:[%s1 + $0x20] sm:$0xf]
  %v56 = vunpack.c.l.b16 %v15
  %v57 = vunpack.c.l.b16 %v16
  %v58 = vunpack.c.l.b16 %v17
  %v59 = vunpack.c.l.b16 %v18
  %v60 = vunpack.c.l.b16 %v19
  %v61 = vunpack.c.l.b16 %v20
  %v62 = vunpack.c.l.b16 %v21
  %v63 = vunpack.c.l.b16 %v22
  %v64 = vunpack.c.l.b16 %v23
  %v65 = vunpack.c.l.b16 %v24
  %v66 = vunpack.c.l.b16 %v25
  %v67 = vunpack.c.l.b16 %v26
  %v68 = vunpack.c.l.b16 %v27
  %v69 = vunpack.c.l.b16 %v28
  %v70 = vunpack.c.l.b16 %v29
  %v71 = vunpack.c.l.b16 %v30
  %v72 = vpack.c.b16 %v57, %v56
  %v73 = vpack.c.b16 %v59, %v58
  %v74 = vpack.c.b16 %v61, %v60
  %v75 = vpack.c.b16 %v63, %v62
  %v76 = vpack.c.b16 %v65, %v64
  %v77 = vpack.c.b16 %v67, %v66
  %v78 = vpack.c.b16 %v69, %v68
  %v79 = vpack.c.b16 %v71, %v70
  %v89 = vunpack.c.l.b16 %v31
  %v90 = vunpack.c.l.b16 %v32
  %v91 = vunpack.c.l.b16 %v33
  %v92 = vunpack.c.l.b16 %v34
  %v93 = vunpack.c.l.b16 %v35
  %v94 = vunpack.c.l.b16 %v36
  %v95 = vunpack.c.l.b16 %v37
  %v96 = vunpack.c.l.b16 %v38
  %v97 = vunpack.c.l.b16 %v39
  %v98 = vpack.c.b16 %v90, %v89
  %v99 = vpack.c.b16 %v92, %v91
  %v100 = vpack.c.b16 %v94, %v93
  %v101 = vpack.c.b16 %v96, %v95
  %v102 = vpack.c.b16 %v97, %v97
  %vm107 = vcmask 588800
  %v109 = vsel %vm107, %v72, 0
  %v112 = vsel %vm107, %v73, 0
  %v115 = vsel %vm107, %v74, 0
  %v118 = vsel %vm107, %v75, 0
  %v121 = vsel %vm107, %v76, 0
  %v124 = vsel %vm107, %v77, 0
  %v127 = vsel %vm107, %v78, 0
  %v130 = vsel %vm107, %v79, 0
  %vm132 = vcmask 1043456
  %v134 = vsel %vm132, %v102, 0
  %136 = vmatprep.subr.bf16.mxu0 0
  %137 = vmatpush1.bf16.msra.mxu0 %v98
  %138 = vmatprep.subr.bf16.mxu0 0
  %139 = vmatpush1.bf16.msra.mxu0 %v99
  %140 = vmatprep.subr.bf16.mxu0 0
  %141 = vmatpush1.bf16.msra.mxu0 %v100
  %142 = vmatprep.subr.bf16.mxu0 0
  %143 = vmatpush1.bf16.msra.mxu0 %v101
  %144 = vmatprep.subr.bf16.mxu0 0
  %145 = vmatpush1.bf16.msra.mxu0 %v134
  %146 = vmatprep.subr.bf16.mxu0 0
  %147 = vmatpush1.bf16.msra.mxu0 0
  %148 = vmatprep.subr.bf16.mxu0 0
  %149 = vmatpush1.bf16.msra.mxu0 0
  %150 = vmatprep.subr.bf16.mxu0 0
  %151 = vmatpush1.bf16.msra.mxu0 0
  %152 = vmatprep.subr.bf16.mxu0 0
  %153 = vmatpush1.bf16.msra.mxu0 0
  %154 = vmatprep.subr.bf16.mxu0 0
  %155 = vmatpush1.bf16.msra.mxu0 0
  %156 = vmatprep.subr.bf16.mxu0 0
  %157 = vmatpush1.bf16.msra.mxu0 0
  %158 = vmatprep.subr.bf16.mxu0 0
  %159 = vmatpush1.bf16.msra.mxu0 0
  %160 = vmatprep.subr.bf16.mxu0 0
  %161 = vmatpush1.bf16.msra.mxu0 0
  %162 = vmatprep.subr.bf16.mxu0 0
  %163 = vmatpush1.bf16.msra.mxu0 0
  %164 = vmatprep.subr.bf16.mxu0 0
  %165 = vmatpush1.bf16.msra.mxu0 0
  %166 = vmatprep.subr.bf16.mxu0 0
  %167 = vmatpush1.bf16.msra.mxu0 0
  %168 = vmatprep.mubr.bf16.mxu0 0
  %169 = vmatmul.mubr.bf16.gmra.mrb[0].mxu0 %v109
  %v170 = vpop.f32.mrb[0].mxu0
  %v171 = vadd.f32 0.0, %v170
  %v172 = vpop.f32.mrb[0].mxu0
  %v173 = vpop.f32.mrb[0].mxu0
  %v174 = vadd.f32 0.0, %v173
  %v175 = vpop.f32.mrb[0].mxu0
  %176 = vmatprep.mubr.bf16.mxu0 0
  %177 = vmatmul.mubr.bf16.gmra.mrb[0].mxu0 %v112
  %v178 = vpop.f32.mrb[0].mxu0
  %v179 = vadd.f32 0.0, %v178
  %v180 = vpop.f32.mrb[0].mxu0
  %v181 = vpop.f32.mrb[0].mxu0
  %v182 = vadd.f32 0.0, %v181
  %v183 = vpop.f32.mrb[0].mxu0
  %184 = vmatprep.mubr.bf16.mxu0 0
  %185 = vmatmul.mubr.bf16.gmra.mrb[0].mxu0 %v115
  %v186 = vpop.f32.mrb[0].mxu0
  %v187 = vadd.f32 0.0, %v186
  %v188 = vpop.f32.mrb[0].mxu0
  %v189 = vpop.f32.mrb[0].mxu0
  %v190 = vadd.f32 0.0, %v189
  %v191 = vpop.f32.mrb[0].mxu0
  %192 = vmatprep.mubr.bf16.mxu0 0
  %193 = vmatmul.mubr.bf16.gmra.mrb[0].mxu0 %v118
  %v194 = vpop.f32.mrb[0].mxu0
  %v195 = vadd.f32 0.0, %v194
  %v196 = vpop.f32.mrb[0].mxu0
  %v197 = vpop.f32.mrb[0].mxu0
  %v198 = vadd.f32 0.0, %v197
  %v199 = vpop.f32.mrb[0].mxu0
  %200 = vmatprep.mubr.bf16.mxu0 0
  %201 = vmatmul.mubr.bf16.gmra.mrb[0].mxu0 %v121
  %v202 = vpop.f32.mrb[0].mxu0
  %v203 = vadd.f32 0.0, %v202
  %v204 = vpop.f32.mrb[0].mxu0
  %v205 = vpop.f32.mrb[0].mxu0
  %v206 = vadd.f32 0.0, %v205
  %v207 = vpop.f32.mrb[0].mxu0
  %208 = vmatprep.mubr.bf16.mxu0 0
  %209 = vmatmul.mubr.bf16.gmra.mrb[0].mxu0 %v124
  %v210 = vpop.f32.mrb[0].mxu0
  %v211 = vadd.f32 0.0, %v210
  %v212 = vpop.f32.mrb[0].mxu0
  %v213 = vpop.f32.mrb[0].mxu0
  %v214 = vadd.f32 0.0, %v213
  %v215 = vpop.f32.mrb[0].mxu0
  %216 = vmatprep.mubr.bf16.mxu0 0
  %217 = vmatmul.mubr.bf16.gmra.mrb[0].mxu0 %v127
  %v218 = vpop.f32.mrb[0].mxu0
  %v219 = vadd.f32 0.0, %v218
  %v220 = vpop.f32.mrb[0].mxu0
  %v221 = vpop.f32.mrb[0].mxu0
  %v222 = vadd.f32 0.0, %v221
  %v223 = vpop.f32.mrb[0].mxu0
  %224 = vmatprep.mubr.bf16.mxu0 0
  %225 = vmatmul.mubr.bf16.gmra.mrb[0].mxu0 %v130
  %v226 = vpop.f32.mrb[0].mxu0
  %v227 = vadd.f32 0.0, %v226
  %v228 = vpop.f32.mrb[0].mxu0
  %v229 = vpop.f32.mrb[0].mxu0
  %v230 = vadd.f32 0.0, %v229
  %v231 = vpop.f32.mrb[0].mxu0
  %232 = vdwg.mxu0
  %233 = vst [vmem:[%s2] sm:$0xff] %v171
  %234 = vst [vmem:[%s2 + $0x8] sm:$0xff] %v174
  %235 = vst [vmem:[%s2 + $0x10] sm:$0xff] %v179
  %236 = vst [vmem:[%s2 + $0x18] sm:$0xff] %v182
  %237 = vst [vmem:[%s2 + $0x20] sm:$0xff] %v187
  %238 = vst [vmem:[%s2 + $0x28] sm:$0xff] %v190
  %239 = vst [vmem:[%s2 + $0x30] sm:$0xff] %v195
  %240 = vst [vmem:[%s2 + $0x38] sm:$0xff] %v198
  %241 = vst [vmem:[%s2 + $0x40] sm:$0xff] %v203
  %242 = vst [vmem:[%s2 + $0x48] sm:$0xff] %v206
  %243 = vst [vmem:[%s2 + $0x50] sm:$0xff] %v211
  %244 = vst [vmem:[%s2 + $0x58] sm:$0xff] %v214
  %245 = vst [vmem:[%s2 + $0x60] sm:$0xff] %v219
  %246 = vst [vmem:[%s2 + $0x68] sm:$0xff] %v222
  %247 = vst [vmem:[%s2 + $0x70] sm:$0xff] %v227
  %248 = vst [vmem:[%s2 + $0x78] sm:$0xff] %v230
  %v249 = vadd.f32 %v171, %v174
  %v250 = vadd.f32 %v249, %v179
  %v251 = vadd.f32 %v250, %v182
  %v252 = vadd.f32 %v251, %v187
  %v253 = vadd.f32 %v252, %v190
  %v254 = vadd.f32 %v253, %v195
  %v255 = vadd.f32 %v254, %v198
  %v256 = vadd.f32 %v255, %v203
  %v257 = vadd.f32 %v256, %v206
  %v258 = vadd.f32 %v257, %v211
  %v259 = vadd.f32 %v258, %v214
  %v260 = vadd.f32 %v259, %v219
  %v261 = vadd.f32 %v260, %v222
  %v262 = vadd.f32 %v261, %v227
  %v263 = vadd.f32 %v262, %v230
  %v264 = vrot.slane %v263, 4
  %v265 = vadd.f32 %v263, %v264
  %v266 = vrot.slane %v265, 2
  %v267 = vadd.f32 %v265, %v266
  %v268 = vrot.slane %v267, 1
  %v269 = vadd.f32 %v267, %v268
  %270 = vst [vmem:[%s3] sm:$0x1] %v269
  %v271 = vmul.f32 %v171, %v171
  %v272 = vmul.f32 %v174, %v174
  %v273 = vmul.f32 %v179, %v179
  %v274 = vmul.f32 %v182, %v182
  %v275 = vmul.f32 %v187, %v187
  %v276 = vmul.f32 %v190, %v190
  %v277 = vmul.f32 %v195, %v195
  %v278 = vmul.f32 %v198, %v198
  %v279 = vmul.f32 %v203, %v203
  %v280 = vmul.f32 %v206, %v206
  %v281 = vmul.f32 %v211, %v211
  %v282 = vmul.f32 %v214, %v214
  %v283 = vmul.f32 %v219, %v219
  %v284 = vmul.f32 %v222, %v222
  %v285 = vmul.f32 %v227, %v227
  %v286 = vmul.f32 %v230, %v230
  %v287 = vadd.f32 %v271, %v272
  %v288 = vadd.f32 %v287, %v273
  %v289 = vadd.f32 %v288, %v274
  %v290 = vadd.f32 %v289, %v275
  %v291 = vadd.f32 %v290, %v276
  %v292 = vadd.f32 %v291, %v277
  %v293 = vadd.f32 %v292, %v278
  %v294 = vadd.f32 %v293, %v279
  %v295 = vadd.f32 %v294, %v280
  %v296 = vadd.f32 %v295, %v281
  %v297 = vadd.f32 %v296, %v282
  %v298 = vadd.f32 %v297, %v283
  %v299 = vadd.f32 %v298, %v284
  %v300 = vadd.f32 %v299, %v285
  %v301 = vadd.f32 %v300, %v286
  %v302 = vrot.slane %v301, 4
  %v303 = vadd.f32 %v301, %v302
  %v304 = vrot.slane %v303, 2
  %v305 = vadd.f32 %v303, %v304
  %v306 = vrot.slane %v305, 1
  %v307 = vadd.f32 %v305, %v306
  %308 = vst [vmem:[%s4] sm:$0x1] %v307
  // Predicated region
  $region10: #{basic_block.7} parent=0 // pred_check
    _
  $region11: #{basic_block.7} parent=0 // pred_check_branch
    %310 = sbr.rel (0) target = $region13
  $region12: #{basic_block.7} parent=0 // pred_region
    _
  $region13: #{basic_block.7} parent=0 // pred_fallthru
    _
  // Predicated region
  $region14: #{basic_block.7} parent=0 // pred_check
    _
  $region15: #{basic_block.7} parent=0 // pred_check_branch
    %312 = sbr.rel (0) target = $region17
  $region16: #{basic_block.7} parent=0 // pred_region
    _
  $region17: #{basic_block.7} parent=0 // pred_fallthru
    _
  // Predicated region
  $region18: #{basic_block.7} parent=0 // pred_check
    _
  $region19: #{basic_block.7} parent=0 // pred_check_branch
    %314 = sbr.rel (0) target = $region21
  $region20: #{basic_block.7} parent=0 // pred_region
    _
  $region21: #{basic_block.7} parent=0 // pred_fallthru
    _
  // Predicated region
  $region22: #{basic_block.7} parent=0 // pred_check
    _
  $region23: #{basic_block.7} parent=0 // pred_check_branch
    %316 = sbr.rel (0) target = $region25
  $region24: #{basic_block.7} parent=0 // pred_region
    _
  $region25: #{basic_block.7} parent=0 // pred_fallthru
    _
  // Predicated region
  $region26: #{basic_block.7} parent=0 // pred_check
    _
  $region27: #{basic_block.7} parent=0 // pred_check_branch
    %318 = sbr.rel (0) target = $region29
  $region28: #{basic_block.7} parent=0 // pred_region
    _
  $region29: #{basic_block.7} parent=0 // pred_fallthru
    _
  // Predicated region
  $region30: #{basic_block.7} parent=0 // pred_check
    _
  $region31: #{basic_block.7} parent=0 // pred_check_branch
    %320 = sbr.rel (0) target = $region33
  $region32: #{basic_block.7} parent=0 // pred_region
    _
  $region33: #{basic_block.7} parent=0 // pred_fallthru
    _

</llo_original>
